<compile_context>
chip_gen: v5e
topology: v5e:2x2
jax: 0.10.0
libtpu: 0.0.40
codegen_flags: <defaults>
</compile_context>

<pallas_src>
import jax
import jax.numpy as jnp
from jax import lax
from jax.experimental import pallas as pl
from jax.experimental.pallas import tpu as pltpu


_MAX_TRACE_TIME_UNROLL = 64
_MAX_BATCH_TILE = 512


def _tpu_generation_caps():
    """Returns (vmem_cap_bytes, num_tensorcores) with conservative fallbacks."""
    try:
        kind = jax.devices()[0].device_kind.lower()
    except Exception:  # pragma: no cover - detection is best-effort
        kind = ""
    if "v7" in kind:
        # v7x: 64 MiB VMEM per TensorCore, 2 TCs per chip.
        return 40 << 20, 2
    if ("v6" in kind) or ("v5" in kind):
        # v5e / v6e: 128 MiB VMEM, 1 TC.
        return 96 << 20, 1
    # Unknown chip: be conservative on VMEM, assume a single core.
    return 40 << 20, 1


def _footprint_bytes(bt, T1, S, C):
    """Approximate VMEM footprint of one batch tile (double-buffered)."""
    out_b = 2 * bt * T1 * (S + C + 1) * 4            # states/controls/costs, 2x buffered
    in_b = 2 * (bt * S + S * (C + S) + C * S + S + 2 * C) * 4
    epi_b = bt * T1 * (S + C) * 4                    # cost-epilogue slab headroom
    return out_b + in_b + epi_b


def _choose_batch_tile(B, T1, S, C, vmem_cap_bytes, num_tc):
    """Largest 8-multiple tile dividing B that fits the VMEM budget.

    On multi-TC chips the tile is additionally capped so the grid has at
    least `num_tc` entries (so dimension_semantics=("parallel",) shards).
    """
    if B <= 8 or B % 8 != 0:
        # Single full-batch tile (legal: block shape equals the full array).
        return B
    budget = int(0.75 * vmem_cap_bytes)
    max_bt = B if num_tc <= 1 else max(B // num_tc, 8)
    max_bt = min(max_bt, _MAX_BATCH_TILE)
    best = 8
    for bt in range(8, min(B, _MAX_BATCH_TILE) + 1, 8):
        if B % bt != 0 or bt > max_bt:
            continue
        if _footprint_bytes(bt, T1, S, C) <= budget:
            best = max(best, bt)
    return best


def _rollout_kernel(steps):
    """Builds the kernel body for a fixed (static) number of steps."""
    unroll_at_trace_time = steps <= _MAX_TRACE_TIME_UNROLL

    def kernel(x0_ref, wcat_ref, bk_ref, bm_ref, q_ref, r_ref,
               states_ref, costs_ref, controls_ref):
        C, S = bm_ref.shape            # static Python ints
        BT = x0_ref.shape[0]

        # ---- hoist loop-invariant loads / broadcasts (done exactly once) ----
        w_cat = wcat_ref[...]                                   # [S, C+S] == [Wk | A]
        bm = bm_ref[...]                                        # [C, S]
        bk_b = jnp.broadcast_to(bk_ref[...], (BT, C))           # hoisted bias broadcast

        def step(i, x):
            # Single MXU issue covers both x@Wk and x@A.
            pre = jnp.dot(x, w_cat, preferred_element_type=jnp.float32)   # [BT, C+S]
            u = jnp.tanh(pre[:, :C] + bk_b)                               # [BT, C]
            x_next = pre[:, C:] + jnp.dot(u, bm,
                                          preferred_element_type=jnp.float32)
            # Stores are off the serial x -> x_next chain; written directly in
            # the final [B, T+1, *] layout (no wrapper transpose needed).
            states_ref[:, i, :] = x
            controls_ref[:, i, :] = u
            return x_next

        x = x0_ref[...]
        if unroll_at_trace_time:
            # Full trace-time unroll: the scheduler overlaps the stores and the
            # x@A realign with the serial x -> Wk -> tanh -> Bm chain.
            for i in range(steps):
                x = step(i, x)
        else:
            # Partially-unrolled visible loop keeps cross-iteration visibility.
            x = lax.fori_loop(0, steps, step, x, unroll=8)

        # ---- terminal entries (matches the PyTorch loop epilogue) ----
        # Only the Wk columns are needed here; x@A would be discarded.
        u_last = jnp.tanh(jnp.dot(x, w_cat[:, :C],
                                  preferred_element_type=jnp.float32) + bk_b)
        states_ref[:, steps, :] = x
        controls_ref[:, steps, :] = u_last

        # ---- all T+1 step costs in one batched pass (never feeds the
        #      recurrence, so it stays completely off the serial chain) ----
        xs = states_ref[...]                           # [BT, T+1, S]
        us = controls_ref[...]                         # [BT, T+1, C]
        q = q_ref[...].reshape(1, 1, S)
        r = r_ref[...].reshape(1, 1, C)
        costs_ref[...] = (jnp.sum(q * xs * xs, axis=-1)
                          + jnp.sum(r * us * us, axis=-1))   # [BT, T+1]

    return kernel


def controlled_rollout(state, params, steps, return_controls=False):
    """JAX wrapper: one pallas_call runs the entire rollout."""
    wk, bk, a, bm, q, r = params
    B, S = state.shape
    C = wk.shape[1]
    T1 = steps + 1

    # Loop-invariant weight prep: fuse x@Wk and x@A into one matmul per step.
    w_cat = jnp.concatenate([wk, a], axis=1)          # [S, C+S]

    # Generation-aware batch tile: as large as the VMEM budget allows, but with
    # >= num_tc grid tiles on multi-TensorCore chips so "parallel" shards.
    vmem_cap, num_tc = _tpu_generation_caps()
    BT = _choose_batch_tile(B, T1, S, C, vmem_cap, num_tc)
    grid = (B // BT,)

    out_shape = (
        jax.ShapeDtypeStruct((B, T1, S), jnp.float32),   # states   [B, T+1, S]
        jax.ShapeDtypeStruct((B, T1), jnp.float32),      # costs    [B, T+1]
        jax.ShapeDtypeStruct((B, T1, C), jnp.float32),   # controls [B, T+1, C]
    )

    # Advisory cost estimate for XLA's scheduler.
    flops = 2 * B * (steps * S * (C + S) + (steps + 1) * S * C + steps * C * S)
    transcendentals = B * (steps + 1) * C
    bytes_accessed = 4 * (B * S + S * (C + S) + C + C * S + S + C
                          + B * T1 * (S + C + 1))

    block_bytes = _footprint_bytes(BT, T1, S, C)
    vmem_limit = int(min(max(2 * block_bytes + (1 << 20), 16 << 20), vmem_cap))

    states, costs, controls = pl.pallas_call(
        _rollout_kernel(steps),
        out_shape=out_shape,
        grid_spec=pltpu.PrefetchScalarGridSpec(
            num_scalar_prefetch=0,
            grid=grid,
            in_specs=[
                pl.BlockSpec((BT, S), lambda b: (b, 0)),        # x0 (batch tile)
                pl.BlockSpec((S, C + S), lambda b: (0, 0)),     # [Wk | A]
                pl.BlockSpec((1, C), lambda b: (0, 0)),         # bk
                pl.BlockSpec((C, S), lambda b: (0, 0)),         # Bm
                pl.BlockSpec((1, S), lambda b: (0, 0)),         # Q diag
                pl.BlockSpec((1, C), lambda b: (0, 0)),         # R diag
            ],
            out_specs=[
                pl.BlockSpec((BT, T1, S), lambda b: (b, 0, 0)),  # states
                pl.BlockSpec((BT, T1), lambda b: (b, 0)),        # costs
                pl.BlockSpec((BT, T1, C), lambda b: (b, 0, 0)),  # controls
            ],
        ),
        compiler_params=pltpu.CompilerParams(
            dimension_semantics=("parallel",),
            vmem_limit_bytes=vmem_limit,
        ),
        cost_estimate=pl.CostEstimate(
            flops=flops,
            transcendentals=transcendentals,
            bytes_accessed=bytes_accessed,
        ),
    )(state, w_cat, bk, bm, q, r)

    if return_controls:
        return states, costs, controls
    return states, costs


def _reference_rollout(state, params, steps):
    """Pure-JAX reference mirroring the PyTorch loop (for a sanity check)."""
    wk, bk, a, bm, q, r = params
    states, costs, controls = [], [], []
    x = state
    for _ in range(steps):
        u = jnp.tanh(x @ wk + bk)
        c = jnp.sum(q * x * x, -1) + jnp.sum(r * u * u, -1)
        states.append(x)
        costs.append(c)
        controls.append(u)
        x = x @ a + u @ bm
    u = jnp.tanh(x @ wk + bk)
    c = jnp.sum(q * x * x, -1) + jnp.sum(r * u * u, -1)
    states.append(x)
    costs.append(c)
    controls.append(u)
    return (jnp.stack(states).transpose(1, 0, 2),
            jnp.stack(costs).transpose(1, 0),
            jnp.stack(controls).transpose(1, 0, 2))


if __name__ == "__main__":
    B, S, C, STEPS = 16, 32, 16, 8

    key = jax.random.PRNGKey(0)
    k0, k1, k2, k3, k4 = jax.random.split(key, 5)

    x0 = jax.random.normal(k0, (B, S), jnp.float32)
    # controller params
    wk = 0.1 * jax.random.normal(k1, (S, C), jnp.float32)
    bk = 0.01 * jax.random.normal(k2, (1, C), jnp.float32)
    # system params: mildly contracting linear dynamics
    a = 0.9 * jnp.eye(S, dtype=jnp.float32) + 0.02 * jax.random.normal(k3, (S, S), jnp.float32)
    bm = 0.1 * jax.random.normal(k4, (C, S), jnp.float32)
    # diagonal quadratic cost weights
    q = jnp.ones((1, S), jnp.float32)
    r = 0.1 * jnp.ones((1, C), jnp.float32)

    params = (wk, bk, a, bm, q, r)

    states, costs, controls = controlled_rollout(x0, params, STEPS, return_controls=True)
    jax.block_until_ready((states, costs, controls))

    # sanity check vs pure-JAX reference
    rs, rc, ru = _reference_rollout(x0, params, STEPS)
    assert states.shape == (B, STEPS + 1, S)
    assert costs.shape == (B, STEPS + 1)
    assert controls.shape == (B, STEPS + 1, C)
    assert jnp.allclose(states, rs, atol=1e-4, rtol=1e-4)
    assert jnp.allclose(costs, rc, atol=1e-4, rtol=1e-4)
    assert jnp.allclose(controls, ru, atol=1e-4, rtol=1e-4)

    print("KERNEL_OK")
</pallas_src>

<mosaic_0001>
module attributes {stable_mosaic.version = 11 : i64} {
  func.func @kernel(%arg0: i32, %arg1: memref<16x32xf32, #tpu.memory_space<vmem>>, %arg2: memref<32x48xf32, #tpu.memory_space<vmem>>, %arg3: memref<1x16xf32, #tpu.memory_space<vmem>>, %arg4: memref<16x32xf32, #tpu.memory_space<vmem>>, %arg5: memref<1x32xf32, #tpu.memory_space<vmem>>, %arg6: memref<1x16xf32, #tpu.memory_space<vmem>>, %arg7: memref<16x9x32xf32, #tpu.memory_space<vmem>>, %arg8: memref<16x9xf32, #tpu.memory_space<vmem>>, %arg9: memref<16x9x16xf32, #tpu.memory_space<vmem>>) attributes {dimension_semantics = [#tpu.dimension_semantics<parallel>], iteration_bounds = array<i64: 1>, scalar_prefetch = 0 : i64, scratch_operands = 0 : i64, tpu.core_type = #tpu.core_type<tc>, window_params = [{transform_indices = @transform_0, window_bounds = array<i64: 16, 32>}, {pipeline_mode = #tpu.pipeline_mode<synchronous>, transform_indices = @transform_1, window_bounds = array<i64: 32, 48>}, {pipeline_mode = #tpu.pipeline_mode<synchronous>, transform_indices = @transform_2, window_bounds = array<i64: 1, 16>}, {pipeline_mode = #tpu.pipeline_mode<synchronous>, transform_indices = @transform_3, window_bounds = array<i64: 16, 32>}, {pipeline_mode = #tpu.pipeline_mode<synchronous>, transform_indices = @transform_4, window_bounds = array<i64: 1, 32>}, {pipeline_mode = #tpu.pipeline_mode<synchronous>, transform_indices = @transform_5, window_bounds = array<i64: 1, 16>}, {transform_indices = @transform_6, window_bounds = array<i64: 16, 9, 32>}, {transform_indices = @transform_7, window_bounds = array<i64: 16, 9>}, {transform_indices = @transform_8, window_bounds = array<i64: 16, 9, 16>}]} {
    %c0 = arith.constant 0 : index
    %c0_0 = arith.constant 0 : index
    %0 = vector.load %arg2[%c0, %c0_0] : memref<32x48xf32, #tpu.memory_space<vmem>>, vector<32x48xf32>
    %c0_1 = arith.constant 0 : index
    %c0_2 = arith.constant 0 : index
    %1 = vector.load %arg4[%c0_1, %c0_2] : memref<16x32xf32, #tpu.memory_space<vmem>>, vector<16x32xf32>
    %c0_3 = arith.constant 0 : index
    %c0_4 = arith.constant 0 : index
    %2 = vector.load %arg3[%c0_3, %c0_4] : memref<1x16xf32, #tpu.memory_space<vmem>>, vector<1x16xf32>
    %3 = vector.shape_cast %2 : vector<1x16xf32> to vector<1x16xf32>
    %4 = vector.broadcast %3 : vector<1x16xf32> to vector<16x16xf32>
    %c0_5 = arith.constant 0 : index
    %c0_6 = arith.constant 0 : index
    %5 = vector.load %arg1[%c0_5, %c0_6] : memref<16x32xf32, #tpu.memory_space<vmem>>, vector<16x32xf32>
    %cst = arith.constant dense<0.000000e+00> : vector<16x48xf32>
    %6 = tpu.matmul %5, %0, %cst {dimension_numbers = #tpu.dot_dimension_numbers<[1], [0], [0], [1], [0, 0, 1, 1], [], []>} : vector<16x32xf32>, vector<32x48xf32>, vector<16x48xf32> -> vector<16x48xf32>
    %7 = vector.extract_strided_slice %6 {offsets = [0, 0], sizes = [16, 16], strides = [1, 1]} : vector<16x48xf32> to vector<16x16xf32>
    %8 = arith.addf %7, %4 : vector<16x16xf32>
    %9 = math.tanh %8 : vector<16x16xf32>
    %10 = vector.extract_strided_slice %6 {offsets = [0, 16], sizes = [16, 32], strides = [1, 1]} : vector<16x48xf32> to vector<16x32xf32>
    %cst_7 = arith.constant dense<0.000000e+00> : vector<16x32xf32>
    %11 = tpu.matmul %9, %1, %cst_7 {dimension_numbers = #tpu.dot_dimension_numbers<[1], [0], [0], [1], [0, 0, 1, 1], [], []>} : vector<16x16xf32>, vector<16x32xf32>, vector<16x32xf32> -> vector<16x32xf32>
    %12 = arith.addf %10, %11 : vector<16x32xf32>
    %c0_8 = arith.constant 0 : index
    %c0_9 = arith.constant 0 : index
    %c0_10 = arith.constant 0 : index
    %13 = vector.load %arg7[%c0_8, %c0_9, %c0_10] : memref<16x9x32xf32, #tpu.memory_space<vmem>>, vector<16x1x32xf32>
    %14 = vector.shape_cast %13 : vector<16x1x32xf32> to vector<16x32xf32>
    %15 = vector.shape_cast %5 : vector<16x32xf32> to vector<16x1x32xf32>
    tpu.vector_store %arg7[%c0_8, %c0_9, %c0_10], %15 {strides = array<i32>} : memref<16x9x32xf32, #tpu.memory_space<vmem>>, vector<16x1x32xf32>,
    %c0_11 = arith.constant 0 : index
    %c0_12 = arith.constant 0 : index
    %c0_13 = arith.constant 0 : index
    %16 = vector.load %arg9[%c0_11, %c0_12, %c0_13] : memref<16x9x16xf32, #tpu.memory_space<vmem>>, vector<16x1x16xf32>
    %17 = vector.shape_cast %16 : vector<16x1x16xf32> to vector<16x16xf32>
    %18 = vector.shape_cast %9 : vector<16x16xf32> to vector<16x1x16xf32>
    tpu.vector_store %arg9[%c0_11, %c0_12, %c0_13], %18 {strides = array<i32>} : memref<16x9x16xf32, #tpu.memory_space<vmem>>, vector<16x1x16xf32>,
    %cst_14 = arith.constant dense<0.000000e+00> : vector<16x48xf32>
    %19 = tpu.matmul %12, %0, %cst_14 {dimension_numbers = #tpu.dot_dimension_numbers<[1], [0], [0], [1], [0, 0, 1, 1], [], []>} : vector<16x32xf32>, vector<32x48xf32>, vector<16x48xf32> -> vector<16x48xf32>
    %20 = vector.extract_strided_slice %19 {offsets = [0, 0], sizes = [16, 16], strides = [1, 1]} : vector<16x48xf32> to vector<16x16xf32>
    %21 = arith.addf %20, %4 : vector<16x16xf32>
    %22 = math.tanh %21 : vector<16x16xf32>
    %23 = vector.extract_strided_slice %19 {offsets = [0, 16], sizes = [16, 32], strides = [1, 1]} : vector<16x48xf32> to vector<16x32xf32>
    %cst_15 = arith.constant dense<0.000000e+00> : vector<16x32xf32>
    %24 = tpu.matmul %22, %1, %cst_15 {dimension_numbers = #tpu.dot_dimension_numbers<[1], [0], [0], [1], [0, 0, 1, 1], [], []>} : vector<16x16xf32>, vector<16x32xf32>, vector<16x32xf32> -> vector<16x32xf32>
    %25 = arith.addf %23, %24 : vector<16x32xf32>
    %c0_16 = arith.constant 0 : index
    %c1 = arith.constant 1 : index
    %c0_17 = arith.constant 0 : index
    %26 = vector.load %arg7[%c0_16, %c1, %c0_17] : memref<16x9x32xf32, #tpu.memory_space<vmem>>, vector<16x1x32xf32>
    %27 = vector.shape_cast %26 : vector<16x1x32xf32> to vector<16x32xf32>
    %28 = vector.shape_cast %12 : vector<16x32xf32> to vector<16x1x32xf32>
    tpu.vector_store %arg7[%c0_16, %c1, %c0_17], %28 {strides = array<i32>} : memref<16x9x32xf32, #tpu.memory_space<vmem>>, vector<16x1x32xf32>,
    %c0_18 = arith.constant 0 : index
    %c1_19 = arith.constant 1 : index
    %c0_20 = arith.constant 0 : index
    %29 = vector.load %arg9[%c0_18, %c1_19, %c0_20] : memref<16x9x16xf32, #tpu.memory_space<vmem>>, vector<16x1x16xf32>
    %30 = vector.shape_cast %29 : vector<16x1x16xf32> to vector<16x16xf32>
    %31 = vector.shape_cast %22 : vector<16x16xf32> to vector<16x1x16xf32>
    tpu.vector_store %arg9[%c0_18, %c1_19, %c0_20], %31 {strides = array<i32>} : memref<16x9x16xf32, #tpu.memory_space<vmem>>, vector<16x1x16xf32>,
    %cst_21 = arith.constant dense<0.000000e+00> : vector<16x48xf32>
    %32 = tpu.matmul %25, %0, %cst_21 {dimension_numbers = #tpu.dot_dimension_numbers<[1], [0], [0], [1], [0, 0, 1, 1], [], []>} : vector<16x32xf32>, vector<32x48xf32>, vector<16x48xf32> -> vector<16x48xf32>
    %33 = vector.extract_strided_slice %32 {offsets = [0, 0], sizes = [16, 16], strides = [1, 1]} : vector<16x48xf32> to vector<16x16xf32>
    %34 = arith.addf %33, %4 : vector<16x16xf32>
    %35 = math.tanh %34 : vector<16x16xf32>
    %36 = vector.extract_strided_slice %32 {offsets = [0, 16], sizes = [16, 32], strides = [1, 1]} : vector<16x48xf32> to vector<16x32xf32>
    %cst_22 = arith.constant dense<0.000000e+00> : vector<16x32xf32>
    %37 = tpu.matmul %35, %1, %cst_22 {dimension_numbers = #tpu.dot_dimension_numbers<[1], [0], [0], [1], [0, 0, 1, 1], [], []>} : vector<16x16xf32>, vector<16x32xf32>, vector<16x32xf32> -> vector<16x32xf32>
    %38 = arith.addf %36, %37 : vector<16x32xf32>
    %c0_23 = arith.constant 0 : index
    %c2 = arith.constant 2 : index
    %c0_24 = arith.constant 0 : index
    %39 = vector.load %arg7[%c0_23, %c2, %c0_24] : memref<16x9x32xf32, #tpu.memory_space<vmem>>, vector<16x1x32xf32>
    %40 = vector.shape_cast %39 : vector<16x1x32xf32> to vector<16x32xf32>
    %41 = vector.shape_cast %25 : vector<16x32xf32> to vector<16x1x32xf32>
    tpu.vector_store %arg7[%c0_23, %c2, %c0_24], %41 {strides = array<i32>} : memref<16x9x32xf32, #tpu.memory_space<vmem>>, vector<16x1x32xf32>,
    %c0_25 = arith.constant 0 : index
    %c2_26 = arith.constant 2 : index
    %c0_27 = arith.constant 0 : index
    %42 = vector.load %arg9[%c0_25, %c2_26, %c0_27] : memref<16x9x16xf32, #tpu.memory_space<vmem>>, vector<16x1x16xf32>
    %43 = vector.shape_cast %42 : vector<16x1x16xf32> to vector<16x16xf32>
    %44 = vector.shape_cast %35 : vector<16x16xf32> to vector<16x1x16xf32>
    tpu.vector_store %arg9[%c0_25, %c2_26, %c0_27], %44 {strides = array<i32>} : memref<16x9x16xf32, #tpu.memory_space<vmem>>, vector<16x1x16xf32>,
    %cst_28 = arith.constant dense<0.000000e+00> : vector<16x48xf32>
    %45 = tpu.matmul %38, %0, %cst_28 {dimension_numbers = #tpu.dot_dimension_numbers<[1], [0], [0], [1], [0, 0, 1, 1], [], []>} : vector<16x32xf32>, vector<32x48xf32>, vector<16x48xf32> -> vector<16x48xf32>
    %46 = vector.extract_strided_slice %45 {offsets = [0, 0], sizes = [16, 16], strides = [1, 1]} : vector<16x48xf32> to vector<16x16xf32>
    %47 = arith.addf %46, %4 : vector<16x16xf32>
    %48 = math.tanh %47 : vector<16x16xf32>
    %49 = vector.extract_strided_slice %45 {offsets = [0, 16], sizes = [16, 32], strides = [1, 1]} : vector<16x48xf32> to vector<16x32xf32>
    %cst_29 = arith.constant dense<0.000000e+00> : vector<16x32xf32>
    %50 = tpu.matmul %48, %1, %cst_29 {dimension_numbers = #tpu.dot_dimension_numbers<[1], [0], [0], [1], [0, 0, 1, 1], [], []>} : vector<16x16xf32>, vector<16x32xf32>, vector<16x32xf32> -> vector<16x32xf32>
    %51 = arith.addf %49, %50 : vector<16x32xf32>
    %c0_30 = arith.constant 0 : index
    %c3 = arith.constant 3 : index
    %c0_31 = arith.constant 0 : index
    %52 = vector.load %arg7[%c0_30, %c3, %c0_31] : memref<16x9x32xf32, #tpu.memory_space<vmem>>, vector<16x1x32xf32>
    %53 = vector.shape_cast %52 : vector<16x1x32xf32> to vector<16x32xf32>
    %54 = vector.shape_cast %38 : vector<16x32xf32> to vector<16x1x32xf32>
    tpu.vector_store %arg7[%c0_30, %c3, %c0_31], %54 {strides = array<i32>} : memref<16x9x32xf32, #tpu.memory_space<vmem>>, vector<16x1x32xf32>,
    %c0_32 = arith.constant 0 : index
    %c3_33 = arith.constant 3 : index
    %c0_34 = arith.constant 0 : index
    %55 = vector.load %arg9[%c0_32, %c3_33, %c0_34] : memref<16x9x16xf32, #tpu.memory_space<vmem>>, vector<16x1x16xf32>
    %56 = vector.shape_cast %55 : vector<16x1x16xf32> to vector<16x16xf32>
    %57 = vector.shape_cast %48 : vector<16x16xf32> to vector<16x1x16xf32>
    tpu.vector_store %arg9[%c0_32, %c3_33, %c0_34], %57 {strides = array<i32>} : memref<16x9x16xf32, #tpu.memory_space<vmem>>, vector<16x1x16xf32>,
    %cst_35 = arith.constant dense<0.000000e+00> : vector<16x48xf32>
    %58 = tpu.matmul %51, %0, %cst_35 {dimension_numbers = #tpu.dot_dimension_numbers<[1], [0], [0], [1], [0, 0, 1, 1], [], []>} : vector<16x32xf32>, vector<32x48xf32>, vector<16x48xf32> -> vector<16x48xf32>
    %59 = vector.extract_strided_slice %58 {offsets = [0, 0], sizes = [16, 16], strides = [1, 1]} : vector<16x48xf32> to vector<16x16xf32>
    %60 = arith.addf %59, %4 : vector<16x16xf32>
    %61 = math.tanh %60 : vector<16x16xf32>
    %62 = vector.extract_strided_slice %58 {offsets = [0, 16], sizes = [16, 32], strides = [1, 1]} : vector<16x48xf32> to vector<16x32xf32>
    %cst_36 = arith.constant dense<0.000000e+00> : vector<16x32xf32>
    %63 = tpu.matmul %61, %1, %cst_36 {dimension_numbers = #tpu.dot_dimension_numbers<[1], [0], [0], [1], [0, 0, 1, 1], [], []>} : vector<16x16xf32>, vector<16x32xf32>, vector<16x32xf32> -> vector<16x32xf32>
    %64 = arith.addf %62, %63 : vector<16x32xf32>
    %c0_37 = arith.constant 0 : index
    %c4 = arith.constant 4 : index
    %c0_38 = arith.constant 0 : index
    %65 = vector.load %arg7[%c0_37, %c4, %c0_38] : memref<16x9x32xf32, #tpu.memory_space<vmem>>, vector<16x1x32xf32>
    %66 = vector.shape_cast %65 : vector<16x1x32xf32> to vector<16x32xf32>
    %67 = vector.shape_cast %51 : vector<16x32xf32> to vector<16x1x32xf32>
    tpu.vector_store %arg7[%c0_37, %c4, %c0_38], %67 {strides = array<i32>} : memref<16x9x32xf32, #tpu.memory_space<vmem>>, vector<16x1x32xf32>,
    %c0_39 = arith.constant 0 : index
    %c4_40 = arith.constant 4 : index
    %c0_41 = arith.constant 0 : index
    %68 = vector.load %arg9[%c0_39, %c4_40, %c0_41] : memref<16x9x16xf32, #tpu.memory_space<vmem>>, vector<16x1x16xf32>
    %69 = vector.shape_cast %68 : vector<16x1x16xf32> to vector<16x16xf32>
    %70 = vector.shape_cast %61 : vector<16x16xf32> to vector<16x1x16xf32>
    tpu.vector_store %arg9[%c0_39, %c4_40, %c0_41], %70 {strides = array<i32>} : memref<16x9x16xf32, #tpu.memory_space<vmem>>, vector<16x1x16xf32>,
    %cst_42 = arith.constant dense<0.000000e+00> : vector<16x48xf32>
    %71 = tpu.matmul %64, %0, %cst_42 {dimension_numbers = #tpu.dot_dimension_numbers<[1], [0], [0], [1], [0, 0, 1, 1], [], []>} : vector<16x32xf32>, vector<32x48xf32>, vector<16x48xf32> -> vector<16x48xf32>
    %72 = vector.extract_strided_slice %71 {offsets = [0, 0], sizes = [16, 16], strides = [1, 1]} : vector<16x48xf32> to vector<16x16xf32>
    %73 = arith.addf %72, %4 : vector<16x16xf32>
    %74 = math.tanh %73 : vector<16x16xf32>
    %75 = vector.extract_strided_slice %71 {offsets = [0, 16], sizes = [16, 32], strides = [1, 1]} : vector<16x48xf32> to vector<16x32xf32>
    %cst_43 = arith.constant dense<0.000000e+00> : vector<16x32xf32>
    %76 = tpu.matmul %74, %1, %cst_43 {dimension_numbers = #tpu.dot_dimension_numbers<[1], [0], [0], [1], [0, 0, 1, 1], [], []>} : vector<16x16xf32>, vector<16x32xf32>, vector<16x32xf32> -> vector<16x32xf32>
    %77 = arith.addf %75, %76 : vector<16x32xf32>
    %c0_44 = arith.constant 0 : index
    %c5 = arith.constant 5 : index
    %c0_45 = arith.constant 0 : index
    %78 = vector.load %arg7[%c0_44, %c5, %c0_45] : memref<16x9x32xf32, #tpu.memory_space<vmem>>, vector<16x1x32xf32>
    %79 = vector.shape_cast %78 : vector<16x1x32xf32> to vector<16x32xf32>
    %80 = vector.shape_cast %64 : vector<16x32xf32> to vector<16x1x32xf32>
    tpu.vector_store %arg7[%c0_44, %c5, %c0_45], %80 {strides = array<i32>} : memref<16x9x32xf32, #tpu.memory_space<vmem>>, vector<16x1x32xf32>,
    %c0_46 = arith.constant 0 : index
    %c5_47 = arith.constant 5 : index
    %c0_48 = arith.constant 0 : index
    %81 = vector.load %arg9[%c0_46, %c5_47, %c0_48] : memref<16x9x16xf32, #tpu.memory_space<vmem>>, vector<16x1x16xf32>
    %82 = vector.shape_cast %81 : vector<16x1x16xf32> to vector<16x16xf32>
    %83 = vector.shape_cast %74 : vector<16x16xf32> to vector<16x1x16xf32>
    tpu.vector_store %arg9[%c0_46, %c5_47, %c0_48], %83 {strides = array<i32>} : memref<16x9x16xf32, #tpu.memory_space<vmem>>, vector<16x1x16xf32>,
    %cst_49 = arith.constant dense<0.000000e+00> : vector<16x48xf32>
    %84 = tpu.matmul %77, %0, %cst_49 {dimension_numbers = #tpu.dot_dimension_numbers<[1], [0], [0], [1], [0, 0, 1, 1], [], []>} : vector<16x32xf32>, vector<32x48xf32>, vector<16x48xf32> -> vector<16x48xf32>
    %85 = vector.extract_strided_slice %84 {offsets = [0, 0], sizes = [16, 16], strides = [1, 1]} : vector<16x48xf32> to vector<16x16xf32>
    %86 = arith.addf %85, %4 : vector<16x16xf32>
    %87 = math.tanh %86 : vector<16x16xf32>
    %88 = vector.extract_strided_slice %84 {offsets = [0, 16], sizes = [16, 32], strides = [1, 1]} : vector<16x48xf32> to vector<16x32xf32>
    %cst_50 = arith.constant dense<0.000000e+00> : vector<16x32xf32>
    %89 = tpu.matmul %87, %1, %cst_50 {dimension_numbers = #tpu.dot_dimension_numbers<[1], [0], [0], [1], [0, 0, 1, 1], [], []>} : vector<16x16xf32>, vector<16x32xf32>, vector<16x32xf32> -> vector<16x32xf32>
    %90 = arith.addf %88, %89 : vector<16x32xf32>
    %c0_51 = arith.constant 0 : index
    %c6 = arith.constant 6 : index
    %c0_52 = arith.constant 0 : index
    %91 = vector.load %arg7[%c0_51, %c6, %c0_52] : memref<16x9x32xf32, #tpu.memory_space<vmem>>, vector<16x1x32xf32>
    %92 = vector.shape_cast %91 : vector<16x1x32xf32> to vector<16x32xf32>
    %93 = vector.shape_cast %77 : vector<16x32xf32> to vector<16x1x32xf32>
    tpu.vector_store %arg7[%c0_51, %c6, %c0_52], %93 {strides = array<i32>} : memref<16x9x32xf32, #tpu.memory_space<vmem>>, vector<16x1x32xf32>,
    %c0_53 = arith.constant 0 : index
    %c6_54 = arith.constant 6 : index
    %c0_55 = arith.constant 0 : index
    %94 = vector.load %arg9[%c0_53, %c6_54, %c0_55] : memref<16x9x16xf32, #tpu.memory_space<vmem>>, vector<16x1x16xf32>
    %95 = vector.shape_cast %94 : vector<16x1x16xf32> to vector<16x16xf32>
    %96 = vector.shape_cast %87 : vector<16x16xf32> to vector<16x1x16xf32>
    tpu.vector_store %arg9[%c0_53, %c6_54, %c0_55], %96 {strides = array<i32>} : memref<16x9x16xf32, #tpu.memory_space<vmem>>, vector<16x1x16xf32>,
    %cst_56 = arith.constant dense<0.000000e+00> : vector<16x48xf32>
    %97 = tpu.matmul %90, %0, %cst_56 {dimension_numbers = #tpu.dot_dimension_numbers<[1], [0], [0], [1], [0, 0, 1, 1], [], []>} : vector<16x32xf32>, vector<32x48xf32>, vector<16x48xf32> -> vector<16x48xf32>
    %98 = vector.extract_strided_slice %97 {offsets = [0, 0], sizes = [16, 16], strides = [1, 1]} : vector<16x48xf32> to vector<16x16xf32>
    %99 = arith.addf %98, %4 : vector<16x16xf32>
    %100 = math.tanh %99 : vector<16x16xf32>
    %101 = vector.extract_strided_slice %97 {offsets = [0, 16], sizes = [16, 32], strides = [1, 1]} : vector<16x48xf32> to vector<16x32xf32>
    %cst_57 = arith.constant dense<0.000000e+00> : vector<16x32xf32>
    %102 = tpu.matmul %100, %1, %cst_57 {dimension_numbers = #tpu.dot_dimension_numbers<[1], [0], [0], [1], [0, 0, 1, 1], [], []>} : vector<16x16xf32>, vector<16x32xf32>, vector<16x32xf32> -> vector<16x32xf32>
    %103 = arith.addf %101, %102 : vector<16x32xf32>
    %c0_58 = arith.constant 0 : index
    %c7 = arith.constant 7 : index
    %c0_59 = arith.constant 0 : index
    %104 = vector.load %arg7[%c0_58, %c7, %c0_59] : memref<16x9x32xf32, #tpu.memory_space<vmem>>, vector<16x1x32xf32>
    %105 = vector.shape_cast %104 : vector<16x1x32xf32> to vector<16x32xf32>
    %106 = vector.shape_cast %90 : vector<16x32xf32> to vector<16x1x32xf32>
    tpu.vector_store %arg7[%c0_58, %c7, %c0_59], %106 {strides = array<i32>} : memref<16x9x32xf32, #tpu.memory_space<vmem>>, vector<16x1x32xf32>,
    %c0_60 = arith.constant 0 : index
    %c7_61 = arith.constant 7 : index
    %c0_62 = arith.constant 0 : index
    %107 = vector.load %arg9[%c0_60, %c7_61, %c0_62] : memref<16x9x16xf32, #tpu.memory_space<vmem>>, vector<16x1x16xf32>
    %108 = vector.shape_cast %107 : vector<16x1x16xf32> to vector<16x16xf32>
    %109 = vector.shape_cast %100 : vector<16x16xf32> to vector<16x1x16xf32>
    tpu.vector_store %arg9[%c0_60, %c7_61, %c0_62], %109 {strides = array<i32>} : memref<16x9x16xf32, #tpu.memory_space<vmem>>, vector<16x1x16xf32>,
    %110 = vector.extract_strided_slice %0 {offsets = [0, 0], sizes = [32, 16], strides = [1, 1]} : vector<32x48xf32> to vector<32x16xf32>
    %cst_63 = arith.constant dense<0.000000e+00> : vector<16x16xf32>
    %111 = tpu.matmul %103, %110, %cst_63 {dimension_numbers = #tpu.dot_dimension_numbers<[1], [0], [0], [1], [0, 0, 1, 1], [], []>} : vector<16x32xf32>, vector<32x16xf32>, vector<16x16xf32> -> vector<16x16xf32>
    %112 = arith.addf %111, %4 : vector<16x16xf32>
    %113 = math.tanh %112 : vector<16x16xf32>
    %c0_64 = arith.constant 0 : index
    %c8 = arith.constant 8 : index
    %c0_65 = arith.constant 0 : index
    %114 = vector.load %arg7[%c0_64, %c8, %c0_65] : memref<16x9x32xf32, #tpu.memory_space<vmem>>, vector<16x1x32xf32>
    %115 = vector.shape_cast %114 : vector<16x1x32xf32> to vector<16x32xf32>
    %116 = vector.shape_cast %103 : vector<16x32xf32> to vector<16x1x32xf32>
    tpu.vector_store %arg7[%c0_64, %c8, %c0_65], %116 {strides = array<i32>} : memref<16x9x32xf32, #tpu.memory_space<vmem>>, vector<16x1x32xf32>,
    %c0_66 = arith.constant 0 : index
    %c8_67 = arith.constant 8 : index
    %c0_68 = arith.constant 0 : index
    %117 = vector.load %arg9[%c0_66, %c8_67, %c0_68] : memref<16x9x16xf32, #tpu.memory_space<vmem>>, vector<16x1x16xf32>
    %118 = vector.shape_cast %117 : vector<16x1x16xf32> to vector<16x16xf32>
    %119 = vector.shape_cast %113 : vector<16x16xf32> to vector<16x1x16xf32>
    tpu.vector_store %arg9[%c0_66, %c8_67, %c0_68], %119 {strides = array<i32>} : memref<16x9x16xf32, #tpu.memory_space<vmem>>, vector<16x1x16xf32>,
    %c0_69 = arith.constant 0 : index
    %c0_70 = arith.constant 0 : index
    %c0_71 = arith.constant 0 : index
    %120 = vector.load %arg7[%c0_69, %c0_70, %c0_71] : memref<16x9x32xf32, #tpu.memory_space<vmem>>, vector<16x9x32xf32>
    %c0_72 = arith.constant 0 : index
    %c0_73 = arith.constant 0 : index
    %c0_74 = arith.constant 0 : index
    %121 = vector.load %arg9[%c0_72, %c0_73, %c0_74] : memref<16x9x16xf32, #tpu.memory_space<vmem>>, vector<16x9x16xf32>
    %c0_75 = arith.constant 0 : index
    %c0_76 = arith.constant 0 : index
    %122 = vector.load %arg5[%c0_75, %c0_76] : memref<1x32xf32, #tpu.memory_space<vmem>>, vector<1x32xf32>
    %123 = vector.shape_cast %122 : vector<1x32xf32> to vector<1x1x32xf32>
    %c0_77 = arith.constant 0 : index
    %c0_78 = arith.constant 0 : index
    %124 = vector.load %arg6[%c0_77, %c0_78] : memref<1x16xf32, #tpu.memory_space<vmem>>, vector<1x16xf32>
    %125 = vector.shape_cast %124 : vector<1x16xf32> to vector<1x1x16xf32>
    %126 = vector.broadcast %123 : vector<1x1x32xf32> to vector<16x9x32xf32>
    %127 = arith.mulf %126, %120 : vector<16x9x32xf32>
    %128 = arith.mulf %127, %120 : vector<16x9x32xf32>
    %cst_79 = arith.constant dense<0.000000e+00> : vector<16x9xf32>
    %129 = vector.multi_reduction <add>, %128, %cst_79 [2] : vector<16x9x32xf32> to vector<16x9xf32>
    %130 = vector.broadcast %125 : vector<1x1x16xf32> to vector<16x9x16xf32>
    %131 = arith.mulf %130, %121 : vector<16x9x16xf32>
    %132 = arith.mulf %131, %121 : vector<16x9x16xf32>
    %cst_80 = arith.constant dense<0.000000e+00> : vector<16x9xf32>
    %133 = vector.multi_reduction <add>, %132, %cst_80 [2] : vector<16x9x16xf32> to vector<16x9xf32>
    %134 = arith.addf %129, %133 : vector<16x9xf32>
    %c0_81 = arith.constant 0 : index
    %c0_82 = arith.constant 0 : index
    %135 = vector.load %arg8[%c0_81, %c0_82] : memref<16x9xf32, #tpu.memory_space<vmem>>, vector<16x9xf32>
    tpu.vector_store %arg8[%c0_81, %c0_82], %134 {strides = array<i32>} : memref<16x9xf32, #tpu.memory_space<vmem>>, vector<16x9xf32>,
    return
  }
  func.func @transform_0(%arg0: i32) -> (i32, i32) {
    %c0_i32 = arith.constant 0 : i32
    %c0_i32_0 = arith.constant 0 : i32
    return %arg0, %c0_i32 : i32, i32
  }
  func.func @transform_1(%arg0: i32) -> (i32, i32) {
    %c0_i32 = arith.constant 0 : i32
    %c0_i32_0 = arith.constant 0 : i32
    %c0_i32_1 = arith.constant 0 : i32
    return %c0_i32, %c0_i32_0 : i32, i32
  }
  func.func @transform_2(%arg0: i32) -> (i32, i32) {
    %c0_i32 = arith.constant 0 : i32
    %c0_i32_0 = arith.constant 0 : i32
    %c0_i32_1 = arith.constant 0 : i32
    return %c0_i32, %c0_i32_0 : i32, i32
  }
  func.func @transform_3(%arg0: i32) -> (i32, i32) {
    %c0_i32 = arith.constant 0 : i32
    %c0_i32_0 = arith.constant 0 : i32
    %c0_i32_1 = arith.constant 0 : i32
    return %c0_i32, %c0_i32_0 : i32, i32
  }
  func.func @transform_4(%arg0: i32) -> (i32, i32) {
    %c0_i32 = arith.constant 0 : i32
    %c0_i32_0 = arith.constant 0 : i32
    %c0_i32_1 = arith.constant 0 : i32
    return %c0_i32, %c0_i32_0 : i32, i32
  }
  func.func @transform_5(%arg0: i32) -> (i32, i32) {
    %c0_i32 = arith.constant 0 : i32
    %c0_i32_0 = arith.constant 0 : i32
    %c0_i32_1 = arith.constant 0 : i32
    return %c0_i32, %c0_i32_0 : i32, i32
  }
  func.func @transform_6(%arg0: i32) -> (i32, i32, i32) {
    %c0_i32 = arith.constant 0 : i32
    %c0_i32_0 = arith.constant 0 : i32
    %c0_i32_1 = arith.constant 0 : i32
    return %arg0, %c0_i32, %c0_i32_0 : i32, i32, i32
  }
  func.func @transform_7(%arg0: i32) -> (i32, i32) {
    %c0_i32 = arith.constant 0 : i32
    %c0_i32_0 = arith.constant 0 : i32
    return %arg0, %c0_i32 : i32, i32
  }
  func.func @transform_8(%arg0: i32) -> (i32, i32, i32) {
    %c0_i32 = arith.constant 0 : i32
    %c0_i32_0 = arith.constant 0 : i32
    %c0_i32_1 = arith.constant 0 : i32
    return %arg0, %c0_i32, %c0_i32_0 : i32, i32, i32
  }
}

</mosaic_0001>

<llo_original>
// kernel: tpu_custom_call.1
$region0: #{tpu_custom_call.1}
  #allocation0 [shape = 'u32[]', space=smem, size = 0x4, offset = 0x4, fixed_abs, tag = 'smem constant byte address 0x4 - core index']
  #allocation1 [shape = 'u32[72,128]{1,0:T(1,128)}', space=vmem, size = 0x9000, scoped, tag = 'internal scratch']
  %s0 = inlined_call_operand.hbm [shape: f32[16,32], index: 0, kind: input, shape index: {}]
  %s1 = inlined_call_operand.hbm [shape: f32[32,48], index: 1, kind: input, shape index: {}]
  %s2 = inlined_call_operand.vmem [shape: f32[1,16], index: 2, kind: input, shape index: {}]
  %s3 = inlined_call_operand.hbm [shape: f32[16,32], index: 3, kind: input, shape index: {}]
  %s4 = inlined_call_operand.vmem [shape: f32[1,32], index: 4, kind: input, shape index: {}]
  %s5 = inlined_call_operand.vmem [shape: f32[1,16], index: 5, kind: input, shape index: {}]
  %s6 = inlined_call_operand.vmem [shape: f32[16,9,32], index: 6, kind: output, shape index: {0}]
  %s7 = inlined_call_operand.hbm [shape: f32[16,9], index: 7, kind: output, shape index: {1}]
  %s8 = inlined_call_operand.vmem [shape: f32[16,9,16], index: 8, kind: output, shape index: {2}]
  %9 = xla_tuple %s6, %s7, %s8
  %s10 = sld [smem:[#allocation0]]
  $region62: #{tpu_custom_call.1} parent=0
    _
  %s12 = ssub.s32 1, %s10
  %s13 = scalar_select 0, %s12, %s10
  $region1: #{tpu_custom_call.1} parent=0
    #allocation2 [shape = 'u8[8192]{0}', space=vmem, size = 0x2000, scoped, tag = 'input window, operand 0, single buffered']
    #allocation3 [shape = 's32[1]{0}', space=sflag, size = 0x4, scoped, tag = 'scoped memory for tpu_custom_call.1']
    #allocation4 [shape = 's32[1]{0}', space=sflag, size = 0x4, scoped, tag = 'scoped memory for tpu_custom_call.1']
    #allocation5 [shape = 'u8[16384]{0}', space=vmem, size = 0x4000, scoped, tag = 'input window, operand 1, single buffered']
    #allocation6 [shape = 's32[1]{0}', space=sflag, size = 0x4, scoped, tag = 'scoped memory for tpu_custom_call.1']
    #allocation7 [shape = 'u8[8192]{0}', space=vmem, size = 0x2000, scoped, tag = 'input window, operand 3, single buffered']
    #allocation8 [shape = 'u8[8192]{0}', space=vmem, size = 0x2000, scoped, tag = 'output window, operand 1, single buffered']
    %14 = vsyncpa [#allocation3], 0
    %15 = vsyncpa [#allocation6], 0
    %16 = vsyncpa [#allocation4], 0
    // Predicated region
    $region2: #{tpu_custom_call.1} parent=1 // pred_check
      _
    $region3: #{tpu_custom_call.1} parent=1 // pred_check_branch
      %18 = sbr.rel (0) target = $region5
    $region4: #{tpu_custom_call.1} parent=1 // pred_region
      %20 = vsyncadd [#allocation3], 0
      %s21 = sshll.u32 %s0, 4
      %s22 = int_to_ptr.hbm [resolvable:$true] %s21
      %s23 = sshll.u32 [#allocation2], 4
      %s24 = int_to_ptr.vmem [resolvable:$true] %s23
      %29 = dma.hbm_to_vmem [thread:$0]  %s22, 256, %s24, [#allocation3], 128, 128, 8
    $region5: #{tpu_custom_call.1} parent=1 // pred_fallthru
      _
    // Predicated region
    $region6: #{tpu_custom_call.1} parent=1 // pred_check
      _
    $region7: #{tpu_custom_call.1} parent=1 // pred_check_branch
      %31 = sbr.rel (0) target = $region9
    $region8: #{tpu_custom_call.1} parent=1 // pred_region
      %33 = vsyncadd [#allocation6], 0
      %s34 = sshll.u32 %s1, 4
      %s35 = int_to_ptr.hbm [resolvable:$true] %s34
      %s36 = sshll.u32 [#allocation5], 4
      %s37 = int_to_ptr.vmem [resolvable:$true] %s36
      %42 = dma.hbm_to_vmem [thread:$0]  %s35, 512, %s37, [#allocation6], 128, 128, 8
    $region9: #{tpu_custom_call.1} parent=1 // pred_fallthru
      _
    // Predicated region
    $region10: #{tpu_custom_call.1} parent=1 // pred_check
      _
    $region11: #{tpu_custom_call.1} parent=1 // pred_check_branch
      %44 = sbr.rel (0) target = $region13
    $region12: #{tpu_custom_call.1} parent=1 // pred_region
      _
    $region13: #{tpu_custom_call.1} parent=1 // pred_fallthru
      _
    // Predicated region
    $region14: #{tpu_custom_call.1} parent=1 // pred_check
      _
    $region15: #{tpu_custom_call.1} parent=1 // pred_check_branch
      %46 = sbr.rel (0) target = $region17
    $region16: #{tpu_custom_call.1} parent=1 // pred_region
      %48 = vsyncadd [#allocation6], 0
      %s49 = sshll.u32 %s3, 4
      %s50 = int_to_ptr.hbm [resolvable:$true] %s49
      %s51 = sshll.u32 [#allocation7], 4
      %s52 = int_to_ptr.vmem [resolvable:$true] %s51
      %57 = dma.hbm_to_vmem [thread:$0]  %s50, 256, %s52, [#allocation6], 128, 128, 8
    $region17: #{tpu_custom_call.1} parent=1 // pred_fallthru
      _
    // Predicated region
    $region18: #{tpu_custom_call.1} parent=1 // pred_check
      _
    $region19: #{tpu_custom_call.1} parent=1 // pred_check_branch
      %59 = sbr.rel (0) target = $region21
    $region20: #{tpu_custom_call.1} parent=1 // pred_region
      _
    $region21: #{tpu_custom_call.1} parent=1 // pred_fallthru
      _
    // Predicated region
    $region22: #{tpu_custom_call.1} parent=1 // pred_check
      _
    $region23: #{tpu_custom_call.1} parent=1 // pred_check_branch
      %61 = sbr.rel (0) target = $region25
    $region24: #{tpu_custom_call.1} parent=1 // pred_region
      _
    $region25: #{tpu_custom_call.1} parent=1 // pred_fallthru
      _
    // Predicated region
    $region26: #{tpu_custom_call.1} parent=1 // pred_check
      _
    $region27: #{tpu_custom_call.1} parent=1 // pred_check_branch
      %63 = sbr.rel (0) target = $region29
    $region28: #{tpu_custom_call.1} parent=1 // pred_region
      %65 = dma.done [#allocation3], 256
    $region29: #{tpu_custom_call.1} parent=1 // pred_fallthru
      _
    // Predicated region
    $region30: #{tpu_custom_call.1} parent=1 // pred_check
      _
    $region31: #{tpu_custom_call.1} parent=1 // pred_check_branch
      %67 = sbr.rel (0) target = $region33
    $region32: #{tpu_custom_call.1} parent=1 // pred_region
      %69 = dma.done [#allocation6], 512
    $region33: #{tpu_custom_call.1} parent=1 // pred_fallthru
      _
    // Predicated region
    $region34: #{tpu_custom_call.1} parent=1 // pred_check
      _
    $region35: #{tpu_custom_call.1} parent=1 // pred_check_branch
      %71 = sbr.rel (0) target = $region37
    $region36: #{tpu_custom_call.1} parent=1 // pred_region
      %73 = dma.done [#allocation6], 256
    $region37: #{tpu_custom_call.1} parent=1 // pred_fallthru
      _
    %v74 = vld [vmem:[#allocation5] sm:$0xff]
    %v75 = vld [vmem:[#allocation5 + $0x8] sm:$0xff]
    %v76 = vld [vmem:[#allocation5 + $0x10] sm:$0xff]
    %v77 = vld [vmem:[#allocation5 + $0x18] sm:$0xff]
    %v78 = vld [vmem:[#allocation7] sm:$0xff]
    %v79 = vld [vmem:[#allocation7 + $0x8] sm:$0xff]
    %v80 = vld [vmem:[%s2] sm:$0x1]
    %v82 = vperm.slane %v80, 0
    %v84 = vld [vmem:[#allocation2] sm:$0xff]
    %v85 = vld [vmem:[#allocation2 + $0x8] sm:$0xff]
    %vm86 = vcmask 261120
    %v88 = vsel %vm86, %v84, 0
    %v91 = vsel %vm86, %v85, 0
    %93 = vmatpush.msra.mxu0 0.0
    %94 = vmatpush.msra.mxu0 0.0
    %95 = vmatpush.msra.mxu0 0.0
    %96 = vmatpush.msra.mxu0 0.0
    %97 = vmatpush.msra.mxu0 0.0
    %98 = vmatpush.msra.mxu0 0.0
    %99 = vmatpush.msra.mxu0 0.0
    %100 = vmatpush.msra.mxu0 0.0
    %101 = vmatpush.msra.mxu0 0.0
    %102 = vmatpush.msra.mxu0 0.0
    %103 = vmatpush.msra.mxu0 0.0
    %104 = vmatpush.msra.mxu0 0.0
    %105 = vmatpush.msra.mxu0 %v77
    %106 = vmatpush.msra.mxu0 %v76
    %107 = vmatpush.msra.mxu0 %v75
    %108 = vmatpush.msra.mxu0 %v74
    %109 = vmatmul.f32.gmra.mxu0 %v88
    %v110 = vpop.f32.mrf.mxu0
    %v111 = vadd.f32 0.0, %v110
    %112 = vmatmul.f32.gmra.mxu0 %v91
    %v113 = vpop.f32.mrf.mxu0
    %v114 = vadd.f32 0.0, %v113
    %115 = vdwg.mxu0
    %v116 = vadd.f32 %v111, %v82
    %v117 = vadd.f32 %v114, %v82
    %v118 = vtanh.pop %v116
    %v119 = vtanh.pop %v117
    %vm120 = vcmask 130048
    %v122 = vsel %vm120, %v118, 0
    %v125 = vsel %vm120, %v119, 0
    %127 = vmatpush.msra.mxu0 0.0
    %128 = vmatpush.msra.mxu0 0.0
    %129 = vmatpush.msra.mxu0 0.0
    %130 = vmatpush.msra.mxu0 0.0
    %131 = vmatpush.msra.mxu0 0.0
    %132 = vmatpush.msra.mxu0 0.0
    %133 = vmatpush.msra.mxu0 0.0
    %134 = vmatpush.msra.mxu0 0.0
    %135 = vmatpush.msra.mxu0 0.0
    %136 = vmatpush.msra.mxu0 0.0
    %137 = vmatpush.msra.mxu0 0.0
    %138 = vmatpush.msra.mxu0 0.0
    %139 = vmatpush.msra.mxu0 0.0
    %140 = vmatpush.msra.mxu0 0.0
    %141 = vmatpush.msra.mxu0 %v79
    %142 = vmatpush.msra.mxu0 %v78
    %143 = vmatmul.f32.gmra.mxu0 %v122
    %v144 = vpop.f32.mrf.mxu0
    %v145 = vadd.f32 0.0, %v144
    %146 = vmatmul.f32.gmra.mxu0 %v125
    %v147 = vpop.f32.mrf.mxu0
    %v148 = vadd.f32 0.0, %v147
    %149 = vdwg.mxu0
    %152 = vrot.lane.b32.xlu0 %v145, 16
    %v153 = vpop.permute.xlu0 %152
    %154 = vrot.lane.b32.xlu0 %v148, 16
    %v155 = vpop.permute.xlu0 %154
    %v158 = vadd.f32 %v111, %v153
    %v159 = vadd.f32 %v114, %v155
    %v160 = vrot.slane %v84, 1
    %v161 = vrot.slane %v84, 2
    %v162 = vrot.slane %v84, 3
    %v163 = vrot.slane %v84, 4
    %v164 = vrot.slane %v84, 5
    %v165 = vrot.slane %v84, 6
    %v166 = vrot.slane %v84, 7
    %v167 = vrot.slane %v85, 1
    %v168 = vrot.slane %v85, 2
    %v169 = vrot.slane %v85, 3
    %v170 = vrot.slane %v85, 4
    %v171 = vrot.slane %v85, 5
    %v172 = vrot.slane %v85, 6
    %v173 = vrot.slane %v85, 7
    %vm188 = vcmask 253952
    %189 = vst.msk [vmem:[%s6] sm:$0x1] %vm188, %v84
    %190 = vst.msk [vmem:[%s6 + $0x10] sm:$0x1] %vm188, %v160
    %191 = vst.msk [vmem:[%s6 + $0x20] sm:$0x1] %vm188, %v161
    %192 = vst.msk [vmem:[%s6 + $0x30] sm:$0x1] %vm188, %v162
    %193 = vst.msk [vmem:[%s6 + $0x40] sm:$0x1] %vm188, %v163
    %194 = vst.msk [vmem:[%s6 + $0x50] sm:$0x1] %vm188, %v164
    %195 = vst.msk [vmem:[%s6 + $0x60] sm:$0x1] %vm188, %v165
    %196 = vst.msk [vmem:[%s6 + $0x70] sm:$0x1] %vm188, %v166
    %197 = vst.msk [vmem:[%s6 + $0x80] sm:$0x1] %vm188, %v85
    %198 = vst.msk [vmem:[%s6 + $0x90] sm:$0x1] %vm188, %v167
    %199 = vst.msk [vmem:[%s6 + $0xa0] sm:$0x1] %vm188, %v168
    %200 = vst.msk [vmem:[%s6 + $0xb0] sm:$0x1] %vm188, %v169
    %201 = vst.msk [vmem:[%s6 + $0xc0] sm:$0x1] %vm188, %v170
    %202 = vst.msk [vmem:[%s6 + $0xd0] sm:$0x1] %vm188, %v171
    %203 = vst.msk [vmem:[%s6 + $0xe0] sm:$0x1] %vm188, %v172
    %204 = vst.msk [vmem:[%s6 + $0xf0] sm:$0x1] %vm188, %v173
    %v205 = vrot.slane %v118, 1
    %v206 = vrot.slane %v118, 2
    %v207 = vrot.slane %v118, 3
    %v208 = vrot.slane %v118, 4
    %v209 = vrot.slane %v118, 5
    %v210 = vrot.slane %v118, 6
    %v211 = vrot.slane %v118, 7
    %v212 = vrot.slane %v119, 1
    %v213 = vrot.slane %v119, 2
    %v214 = vrot.slane %v119, 3
    %v215 = vrot.slane %v119, 4
    %v216 = vrot.slane %v119, 5
    %v217 = vrot.slane %v119, 6
    %v218 = vrot.slane %v119, 7
    %vm233 = vcmask 122880
    %234 = vst.msk [vmem:[%s8] sm:$0x1] %vm233, %v118
    %235 = vst.msk [vmem:[%s8 + $0x10] sm:$0x1] %vm233, %v205
    %236 = vst.msk [vmem:[%s8 + $0x20] sm:$0x1] %vm233, %v206
    %237 = vst.msk [vmem:[%s8 + $0x30] sm:$0x1] %vm233, %v207
    %238 = vst.msk [vmem:[%s8 + $0x40] sm:$0x1] %vm233, %v208
    %239 = vst.msk [vmem:[%s8 + $0x50] sm:$0x1] %vm233, %v209
    %240 = vst.msk [vmem:[%s8 + $0x60] sm:$0x1] %vm233, %v210
    %241 = vst.msk [vmem:[%s8 + $0x70] sm:$0x1] %vm233, %v211
    %242 = vst.msk [vmem:[%s8 + $0x80] sm:$0x1] %vm233, %v119
    %243 = vst.msk [vmem:[%s8 + $0x90] sm:$0x1] %vm233, %v212
    %244 = vst.msk [vmem:[%s8 + $0xa0] sm:$0x1] %vm233, %v213
    %245 = vst.msk [vmem:[%s8 + $0xb0] sm:$0x1] %vm233, %v214
    %246 = vst.msk [vmem:[%s8 + $0xc0] sm:$0x1] %vm233, %v215
    %247 = vst.msk [vmem:[%s8 + $0xd0] sm:$0x1] %vm233, %v216
    %248 = vst.msk [vmem:[%s8 + $0xe0] sm:$0x1] %vm233, %v217
    %249 = vst.msk [vmem:[%s8 + $0xf0] sm:$0x1] %vm233, %v218
    %252 = vrot.lane.b32.xlu0 %v158, 112
    %v253 = vpop.permute.xlu0 %252
    %254 = vrot.lane.b32.xlu0 %v159, 112
    %v255 = vpop.permute.xlu0 %254
    %v256 = vsel %vm86, %v253, 0
    %v258 = vsel %vm86, %v255, 0
    %260 = vmatpush.msra.mxu0 0.0
    %261 = vmatpush.msra.mxu0 0.0
    %262 = vmatpush.msra.mxu0 0.0
    %263 = vmatpush.msra.mxu0 0.0
    %264 = vmatpush.msra.mxu0 0.0
    %265 = vmatpush.msra.mxu0 0.0
    %266 = vmatpush.msra.mxu0 0.0
    %267 = vmatpush.msra.mxu0 0.0
    %268 = vmatpush.msra.mxu0 0.0
    %269 = vmatpush.msra.mxu0 0.0
    %270 = vmatpush.msra.mxu0 0.0
    %271 = vmatpush.msra.mxu0 0.0
    %272 = vmatpush.msra.mxu0 %v77
    %273 = vmatpush.msra.mxu0 %v76
    %274 = vmatpush.msra.mxu0 %v75
    %275 = vmatpush.msra.mxu0 %v74
    %276 = vmatmul.f32.gmra.mxu0 %v256
    %v277 = vpop.f32.mrf.mxu0
    %v278 = vadd.f32 0.0, %v277
    %279 = vmatmul.f32.gmra.mxu0 %v258
    %v280 = vpop.f32.mrf.mxu0
    %v281 = vadd.f32 0.0, %v280
    %282 = vdwg.mxu0
    %v283 = vadd.f32 %v278, %v82
    %v284 = vadd.f32 %v281, %v82
    %v285 = vtanh.pop %v283
    %v286 = vtanh.pop %v284
    %v288 = vsel %vm120, %v285, 0
    %v291 = vsel %vm120, %v286, 0
    %293 = vmatpush.msra.mxu0 0.0
    %294 = vmatpush.msra.mxu0 0.0
    %295 = vmatpush.msra.mxu0 0.0
    %296 = vmatpush.msra.mxu0 0.0
    %297 = vmatpush.msra.mxu0 0.0
    %298 = vmatpush.msra.mxu0 0.0
    %299 = vmatpush.msra.mxu0 0.0
    %300 = vmatpush.msra.mxu0 0.0
    %301 = vmatpush.msra.mxu0 0.0
    %302 = vmatpush.msra.mxu0 0.0
    %303 = vmatpush.msra.mxu0 0.0
    %304 = vmatpush.msra.mxu0 0.0
    %305 = vmatpush.msra.mxu0 0.0
    %306 = vmatpush.msra.mxu0 0.0
    %307 = vmatpush.msra.mxu0 %v79
    %308 = vmatpush.msra.mxu0 %v78
    %309 = vmatmul.f32.gmra.mxu0 %v288
    %v310 = vpop.f32.mrf.mxu0
    %v311 = vadd.f32 0.0, %v310
    %312 = vmatmul.f32.gmra.mxu0 %v291
    %v313 = vpop.f32.mrf.mxu0
    %v314 = vadd.f32 0.0, %v313
    %315 = vdwg.mxu0
    %318 = vrot.lane.b32.xlu0 %v311, 16
    %v319 = vpop.permute.xlu0 %318
    %320 = vrot.lane.b32.xlu0 %v314, 16
    %v321 = vpop.permute.xlu0 %320
    %v324 = vadd.f32 %v278, %v319
    %v325 = vadd.f32 %v281, %v321
    %v326 = vrot.slane %v158, 1
    %v327 = vrot.slane %v158, 2
    %v328 = vrot.slane %v158, 3
    %v329 = vrot.slane %v158, 4
    %v330 = vrot.slane %v158, 5
    %v331 = vrot.slane %v158, 6
    %v332 = vrot.slane %v158, 7
    %v333 = vrot.slane %v159, 1
    %v334 = vrot.slane %v159, 2
    %v335 = vrot.slane %v159, 3
    %v336 = vrot.slane %v159, 4
    %v337 = vrot.slane %v159, 5
    %v338 = vrot.slane %v159, 6
    %v339 = vrot.slane %v159, 7
    %v340 = vperm.slane %v158, 0
    %v341 = vperm.slane %v326, 0
    %v342 = vperm.slane %v327, 0
    %v343 = vperm.slane %v328, 0
    %v344 = vperm.slane %v329, 0
    %v345 = vperm.slane %v330, 0
    %v346 = vperm.slane %v331, 0
    %v347 = vperm.slane %v332, 0
    %v348 = vperm.slane %v159, 0
    %v349 = vperm.slane %v333, 0
    %v350 = vperm.slane %v334, 0
    %v351 = vperm.slane %v335, 0
    %v352 = vperm.slane %v336, 0
    %v353 = vperm.slane %v337, 0
    %v354 = vperm.slane %v338, 0
    %v355 = vperm.slane %v339, 0
    %356 = vrot.lane.b32.xlu0 %v340, 112
    %v357 = vpop.permute.xlu0 %356
    %358 = vrot.lane.b32.xlu0 %v341, 112
    %v359 = vpop.permute.xlu0 %358
    %360 = vrot.lane.b32.xlu0 %v342, 112
    %v361 = vpop.permute.xlu0 %360
    %362 = vrot.lane.b32.xlu0 %v343, 112
    %v363 = vpop.permute.xlu0 %362
    %364 = vrot.lane.b32.xlu0 %v344, 112
    %v365 = vpop.permute.xlu0 %364
    %366 = vrot.lane.b32.xlu0 %v345, 112
    %v367 = vpop.permute.xlu0 %366
    %368 = vrot.lane.b32.xlu0 %v346, 112
    %v369 = vpop.permute.xlu0 %368
    %370 = vrot.lane.b32.xlu0 %v347, 112
    %v371 = vpop.permute.xlu0 %370
    %372 = vrot.lane.b32.xlu0 %v348, 112
    %v373 = vpop.permute.xlu0 %372
    %374 = vrot.lane.b32.xlu0 %v349, 112
    %v375 = vpop.permute.xlu0 %374
    %376 = vrot.lane.b32.xlu0 %v350, 112
    %v377 = vpop.permute.xlu0 %376
    %378 = vrot.lane.b32.xlu0 %v351, 112
    %v379 = vpop.permute.xlu0 %378
    %380 = vrot.lane.b32.xlu0 %v352, 112
    %v381 = vpop.permute.xlu0 %380
    %382 = vrot.lane.b32.xlu0 %v353, 112
    %v383 = vpop.permute.xlu0 %382
    %384 = vrot.lane.b32.xlu0 %v354, 112
    %v385 = vpop.permute.xlu0 %384
    %386 = vrot.lane.b32.xlu0 %v355, 112
    %v387 = vpop.permute.xlu0 %386
    %404 = vst.msk [vmem:[%s6 + $0x1] sm:$0x1] %vm188, %v357
    %405 = vst.msk [vmem:[%s6 + $0x11] sm:$0x1] %vm188, %v359
    %406 = vst.msk [vmem:[%s6 + $0x21] sm:$0x1] %vm188, %v361
    %407 = vst.msk [vmem:[%s6 + $0x31] sm:$0x1] %vm188, %v363
    %408 = vst.msk [vmem:[%s6 + $0x41] sm:$0x1] %vm188, %v365
    %409 = vst.msk [vmem:[%s6 + $0x51] sm:$0x1] %vm188, %v367
    %410 = vst.msk [vmem:[%s6 + $0x61] sm:$0x1] %vm188, %v369
    %411 = vst.msk [vmem:[%s6 + $0x71] sm:$0x1] %vm188, %v371
    %412 = vst.msk [vmem:[%s6 + $0x81] sm:$0x1] %vm188, %v373
    %413 = vst.msk [vmem:[%s6 + $0x91] sm:$0x1] %vm188, %v375
    %414 = vst.msk [vmem:[%s6 + $0xa1] sm:$0x1] %vm188, %v377
    %415 = vst.msk [vmem:[%s6 + $0xb1] sm:$0x1] %vm188, %v379
    %416 = vst.msk [vmem:[%s6 + $0xc1] sm:$0x1] %vm188, %v381
    %417 = vst.msk [vmem:[%s6 + $0xd1] sm:$0x1] %vm188, %v383
    %418 = vst.msk [vmem:[%s6 + $0xe1] sm:$0x1] %vm188, %v385
    %419 = vst.msk [vmem:[%s6 + $0xf1] sm:$0x1] %vm188, %v387
    %v420 = vrot.slane %v285, 1
    %v421 = vrot.slane %v285, 2
    %v422 = vrot.slane %v285, 3
    %v423 = vrot.slane %v285, 4
    %v424 = vrot.slane %v285, 5
    %v425 = vrot.slane %v285, 6
    %v426 = vrot.slane %v285, 7
    %v427 = vrot.slane %v286, 1
    %v428 = vrot.slane %v286, 2
    %v429 = vrot.slane %v286, 3
    %v430 = vrot.slane %v286, 4
    %v431 = vrot.slane %v286, 5
    %v432 = vrot.slane %v286, 6
    %v433 = vrot.slane %v286, 7
    %448 = vst.msk [vmem:[%s8 + $0x1] sm:$0x1] %vm233, %v285
    %449 = vst.msk [vmem:[%s8 + $0x11] sm:$0x1] %vm233, %v420
    %450 = vst.msk [vmem:[%s8 + $0x21] sm:$0x1] %vm233, %v421
    %451 = vst.msk [vmem:[%s8 + $0x31] sm:$0x1] %vm233, %v422
    %452 = vst.msk [vmem:[%s8 + $0x41] sm:$0x1] %vm233, %v423
    %453 = vst.msk [vmem:[%s8 + $0x51] sm:$0x1] %vm233, %v424
    %454 = vst.msk [vmem:[%s8 + $0x61] sm:$0x1] %vm233, %v425
    %455 = vst.msk [vmem:[%s8 + $0x71] sm:$0x1] %vm233, %v426
    %456 = vst.msk [vmem:[%s8 + $0x81] sm:$0x1] %vm233, %v286
    %457 = vst.msk [vmem:[%s8 + $0x91] sm:$0x1] %vm233, %v427
    %458 = vst.msk [vmem:[%s8 + $0xa1] sm:$0x1] %vm233, %v428
    %459 = vst.msk [vmem:[%s8 + $0xb1] sm:$0x1] %vm233, %v429
    %460 = vst.msk [vmem:[%s8 + $0xc1] sm:$0x1] %vm233, %v430
    %461 = vst.msk [vmem:[%s8 + $0xd1] sm:$0x1] %vm233, %v431
    %462 = vst.msk [vmem:[%s8 + $0xe1] sm:$0x1] %vm233, %v432
    %463 = vst.msk [vmem:[%s8 + $0xf1] sm:$0x1] %vm233, %v433
    %466 = vrot.lane.b32.xlu0 %v324, 112
    %v467 = vpop.permute.xlu0 %466
    %468 = vrot.lane.b32.xlu0 %v325, 112
    %v469 = vpop.permute.xlu0 %468
    %v470 = vsel %vm86, %v467, 0
    %v472 = vsel %vm86, %v469, 0
    %474 = vmatpush.msra.mxu0 0.0
    %475 = vmatpush.msra.mxu0 0.0
    %476 = vmatpush.msra.mxu0 0.0
    %477 = vmatpush.msra.mxu0 0.0
    %478 = vmatpush.msra.mxu0 0.0
    %479 = vmatpush.msra.mxu0 0.0
    %480 = vmatpush.msra.mxu0 0.0
    %481 = vmatpush.msra.mxu0 0.0
    %482 = vmatpush.msra.mxu0 0.0
    %483 = vmatpush.msra.mxu0 0.0
    %484 = vmatpush.msra.mxu0 0.0
    %485 = vmatpush.msra.mxu0 0.0
    %486 = vmatpush.msra.mxu0 %v77
    %487 = vmatpush.msra.mxu0 %v76
    %488 = vmatpush.msra.mxu0 %v75
    %489 = vmatpush.msra.mxu0 %v74
    %490 = vmatmul.f32.gmra.mxu0 %v470
    %v491 = vpop.f32.mrf.mxu0
    %v492 = vadd.f32 0.0, %v491
    %493 = vmatmul.f32.gmra.mxu0 %v472
    %v494 = vpop.f32.mrf.mxu0
    %v495 = vadd.f32 0.0, %v494
    %496 = vdwg.mxu0
    %v497 = vadd.f32 %v492, %v82
    %v498 = vadd.f32 %v495, %v82
    %v499 = vtanh.pop %v497
    %v500 = vtanh.pop %v498
    %v502 = vsel %vm120, %v499, 0
    %v505 = vsel %vm120, %v500, 0
    %507 = vmatpush.msra.mxu0 0.0
    %508 = vmatpush.msra.mxu0 0.0
    %509 = vmatpush.msra.mxu0 0.0
    %510 = vmatpush.msra.mxu0 0.0
    %511 = vmatpush.msra.mxu0 0.0
    %512 = vmatpush.msra.mxu0 0.0
    %513 = vmatpush.msra.mxu0 0.0
    %514 = vmatpush.msra.mxu0 0.0
    %515 = vmatpush.msra.mxu0 0.0
    %516 = vmatpush.msra.mxu0 0.0
    %517 = vmatpush.msra.mxu0 0.0
    %518 = vmatpush.msra.mxu0 0.0
    %519 = vmatpush.msra.mxu0 0.0
    %520 = vmatpush.msra.mxu0 0.0
    %521 = vmatpush.msra.mxu0 %v79
    %522 = vmatpush.msra.mxu0 %v78
    %523 = vmatmul.f32.gmra.mxu0 %v502
    %v524 = vpop.f32.mrf.mxu0
    %v525 = vadd.f32 0.0, %v524
    %526 = vmatmul.f32.gmra.mxu0 %v505
    %v527 = vpop.f32.mrf.mxu0
    %v528 = vadd.f32 0.0, %v527
    %529 = vdwg.mxu0
    %532 = vrot.lane.b32.xlu0 %v525, 16
    %v533 = vpop.permute.xlu0 %532
    %534 = vrot.lane.b32.xlu0 %v528, 16
    %v535 = vpop.permute.xlu0 %534
    %v538 = vadd.f32 %v492, %v533
    %v539 = vadd.f32 %v495, %v535
    %v540 = vrot.slane %v324, 1
    %v541 = vrot.slane %v324, 2
    %v542 = vrot.slane %v324, 3
    %v543 = vrot.slane %v324, 4
    %v544 = vrot.slane %v324, 5
    %v545 = vrot.slane %v324, 6
    %v546 = vrot.slane %v324, 7
    %v547 = vrot.slane %v325, 1
    %v548 = vrot.slane %v325, 2
    %v549 = vrot.slane %v325, 3
    %v550 = vrot.slane %v325, 4
    %v551 = vrot.slane %v325, 5
    %v552 = vrot.slane %v325, 6
    %v553 = vrot.slane %v325, 7
    %v554 = vperm.slane %v324, 0
    %v555 = vperm.slane %v540, 0
    %v556 = vperm.slane %v541, 0
    %v557 = vperm.slane %v542, 0
    %v558 = vperm.slane %v543, 0
    %v559 = vperm.slane %v544, 0
    %v560 = vperm.slane %v545, 0
    %v561 = vperm.slane %v546, 0
    %v562 = vperm.slane %v325, 0
    %v563 = vperm.slane %v547, 0
    %v564 = vperm.slane %v548, 0
    %v565 = vperm.slane %v549, 0
    %v566 = vperm.slane %v550, 0
    %v567 = vperm.slane %v551, 0
    %v568 = vperm.slane %v552, 0
    %v569 = vperm.slane %v553, 0
    %570 = vrot.lane.b32.xlu0 %v554, 112
    %v571 = vpop.permute.xlu0 %570
    %572 = vrot.lane.b32.xlu0 %v555, 112
    %v573 = vpop.permute.xlu0 %572
    %574 = vrot.lane.b32.xlu0 %v556, 112
    %v575 = vpop.permute.xlu0 %574
    %576 = vrot.lane.b32.xlu0 %v557, 112
    %v577 = vpop.permute.xlu0 %576
    %578 = vrot.lane.b32.xlu0 %v558, 112
    %v579 = vpop.permute.xlu0 %578
    %580 = vrot.lane.b32.xlu0 %v559, 112
    %v581 = vpop.permute.xlu0 %580
    %582 = vrot.lane.b32.xlu0 %v560, 112
    %v583 = vpop.permute.xlu0 %582
    %584 = vrot.lane.b32.xlu0 %v561, 112
    %v585 = vpop.permute.xlu0 %584
    %586 = vrot.lane.b32.xlu0 %v562, 112
    %v587 = vpop.permute.xlu0 %586
    %588 = vrot.lane.b32.xlu0 %v563, 112
    %v589 = vpop.permute.xlu0 %588
    %590 = vrot.lane.b32.xlu0 %v564, 112
    %v591 = vpop.permute.xlu0 %590
    %592 = vrot.lane.b32.xlu0 %v565, 112
    %v593 = vpop.permute.xlu0 %592
    %594 = vrot.lane.b32.xlu0 %v566, 112
    %v595 = vpop.permute.xlu0 %594
    %596 = vrot.lane.b32.xlu0 %v567, 112
    %v597 = vpop.permute.xlu0 %596
    %598 = vrot.lane.b32.xlu0 %v568, 112
    %v599 = vpop.permute.xlu0 %598
    %600 = vrot.lane.b32.xlu0 %v569, 112
    %v601 = vpop.permute.xlu0 %600
    %618 = vst.msk [vmem:[%s6 + $0x2] sm:$0x1] %vm188, %v571
    %619 = vst.msk [vmem:[%s6 + $0x12] sm:$0x1] %vm188, %v573
    %620 = vst.msk [vmem:[%s6 + $0x22] sm:$0x1] %vm188, %v575
    %621 = vst.msk [vmem:[%s6 + $0x32] sm:$0x1] %vm188, %v577
    %622 = vst.msk [vmem:[%s6 + $0x42] sm:$0x1] %vm188, %v579
    %623 = vst.msk [vmem:[%s6 + $0x52] sm:$0x1] %vm188, %v581
    %624 = vst.msk [vmem:[%s6 + $0x62] sm:$0x1] %vm188, %v583
    %625 = vst.msk [vmem:[%s6 + $0x72] sm:$0x1] %vm188, %v585
    %626 = vst.msk [vmem:[%s6 + $0x82] sm:$0x1] %vm188, %v587
    %627 = vst.msk [vmem:[%s6 + $0x92] sm:$0x1] %vm188, %v589
    %628 = vst.msk [vmem:[%s6 + $0xa2] sm:$0x1] %vm188, %v591
    %629 = vst.msk [vmem:[%s6 + $0xb2] sm:$0x1] %vm188, %v593
    %630 = vst.msk [vmem:[%s6 + $0xc2] sm:$0x1] %vm188, %v595
    %631 = vst.msk [vmem:[%s6 + $0xd2] sm:$0x1] %vm188, %v597
    %632 = vst.msk [vmem:[%s6 + $0xe2] sm:$0x1] %vm188, %v599
    %633 = vst.msk [vmem:[%s6 + $0xf2] sm:$0x1] %vm188, %v601
    %v634 = vrot.slane %v499, 1
    %v635 = vrot.slane %v499, 2
    %v636 = vrot.slane %v499, 3
    %v637 = vrot.slane %v499, 4
    %v638 = vrot.slane %v499, 5
    %v639 = vrot.slane %v499, 6
    %v640 = vrot.slane %v499, 7
    %v641 = vrot.slane %v500, 1
    %v642 = vrot.slane %v500, 2
    %v643 = vrot.slane %v500, 3
    %v644 = vrot.slane %v500, 4
    %v645 = vrot.slane %v500, 5
    %v646 = vrot.slane %v500, 6
    %v647 = vrot.slane %v500, 7
    %662 = vst.msk [vmem:[%s8 + $0x2] sm:$0x1] %vm233, %v499
    %663 = vst.msk [vmem:[%s8 + $0x12] sm:$0x1] %vm233, %v634
    %664 = vst.msk [vmem:[%s8 + $0x22] sm:$0x1] %vm233, %v635
    %665 = vst.msk [vmem:[%s8 + $0x32] sm:$0x1] %vm233, %v636
    %666 = vst.msk [vmem:[%s8 + $0x42] sm:$0x1] %vm233, %v637
    %667 = vst.msk [vmem:[%s8 + $0x52] sm:$0x1] %vm233, %v638
    %668 = vst.msk [vmem:[%s8 + $0x62] sm:$0x1] %vm233, %v639
    %669 = vst.msk [vmem:[%s8 + $0x72] sm:$0x1] %vm233, %v640
    %670 = vst.msk [vmem:[%s8 + $0x82] sm:$0x1] %vm233, %v500
    %671 = vst.msk [vmem:[%s8 + $0x92] sm:$0x1] %vm233, %v641
    %672 = vst.msk [vmem:[%s8 + $0xa2] sm:$0x1] %vm233, %v642
    %673 = vst.msk [vmem:[%s8 + $0xb2] sm:$0x1] %vm233, %v643
    %674 = vst.msk [vmem:[%s8 + $0xc2] sm:$0x1] %vm233, %v644
    %675 = vst.msk [vmem:[%s8 + $0xd2] sm:$0x1] %vm233, %v645
    %676 = vst.msk [vmem:[%s8 + $0xe2] sm:$0x1] %vm233, %v646
    %677 = vst.msk [vmem:[%s8 + $0xf2] sm:$0x1] %vm233, %v647
    %680 = vrot.lane.b32.xlu0 %v538, 112
    %v681 = vpop.permute.xlu0 %680
    %682 = vrot.lane.b32.xlu0 %v539, 112
    %v683 = vpop.permute.xlu0 %682
    %v684 = vsel %vm86, %v681, 0
    %v686 = vsel %vm86, %v683, 0
    %688 = vmatpush.msra.mxu0 0.0
    %689 = vmatpush.msra.mxu0 0.0
    %690 = vmatpush.msra.mxu0 0.0
    %691 = vmatpush.msra.mxu0 0.0
    %692 = vmatpush.msra.mxu0 0.0
    %693 = vmatpush.msra.mxu0 0.0
    %694 = vmatpush.msra.mxu0 0.0
    %695 = vmatpush.msra.mxu0 0.0
    %696 = vmatpush.msra.mxu0 0.0
    %697 = vmatpush.msra.mxu0 0.0
    %698 = vmatpush.msra.mxu0 0.0
    %699 = vmatpush.msra.mxu0 0.0
    %700 = vmatpush.msra.mxu0 %v77
    %701 = vmatpush.msra.mxu0 %v76
    %702 = vmatpush.msra.mxu0 %v75
    %703 = vmatpush.msra.mxu0 %v74
    %704 = vmatmul.f32.gmra.mxu0 %v684
    %v705 = vpop.f32.mrf.mxu0
    %v706 = vadd.f32 0.0, %v705
    %707 = vmatmul.f32.gmra.mxu0 %v686
    %v708 = vpop.f32.mrf.mxu0
    %v709 = vadd.f32 0.0, %v708
    %710 = vdwg.mxu0
    %v711 = vadd.f32 %v706, %v82
    %v712 = vadd.f32 %v709, %v82
    %v713 = vtanh.pop %v711
    %v714 = vtanh.pop %v712
    %v716 = vsel %vm120, %v713, 0
    %v719 = vsel %vm120, %v714, 0
    %721 = vmatpush.msra.mxu0 0.0
    %722 = vmatpush.msra.mxu0 0.0
    %723 = vmatpush.msra.mxu0 0.0
    %724 = vmatpush.msra.mxu0 0.0
    %725 = vmatpush.msra.mxu0 0.0
    %726 = vmatpush.msra.mxu0 0.0
    %727 = vmatpush.msra.mxu0 0.0
    %728 = vmatpush.msra.mxu0 0.0
    %729 = vmatpush.msra.mxu0 0.0
    %730 = vmatpush.msra.mxu0 0.0
    %731 = vmatpush.msra.mxu0 0.0
    %732 = vmatpush.msra.mxu0 0.0
    %733 = vmatpush.msra.mxu0 0.0
    %734 = vmatpush.msra.mxu0 0.0
    %735 = vmatpush.msra.mxu0 %v79
    %736 = vmatpush.msra.mxu0 %v78
    %737 = vmatmul.f32.gmra.mxu0 %v716
    %v738 = vpop.f32.mrf.mxu0
    %v739 = vadd.f32 0.0, %v738
    %740 = vmatmul.f32.gmra.mxu0 %v719
    %v741 = vpop.f32.mrf.mxu0
    %v742 = vadd.f32 0.0, %v741
    %743 = vdwg.mxu0
    %746 = vrot.lane.b32.xlu0 %v739, 16
    %v747 = vpop.permute.xlu0 %746
    %748 = vrot.lane.b32.xlu0 %v742, 16
    %v749 = vpop.permute.xlu0 %748
    %v752 = vadd.f32 %v706, %v747
    %v753 = vadd.f32 %v709, %v749
    %v754 = vrot.slane %v538, 1
    %v755 = vrot.slane %v538, 2
    %v756 = vrot.slane %v538, 3
    %v757 = vrot.slane %v538, 4
    %v758 = vrot.slane %v538, 5
    %v759 = vrot.slane %v538, 6
    %v760 = vrot.slane %v538, 7
    %v761 = vrot.slane %v539, 1
    %v762 = vrot.slane %v539, 2
    %v763 = vrot.slane %v539, 3
    %v764 = vrot.slane %v539, 4
    %v765 = vrot.slane %v539, 5
    %v766 = vrot.slane %v539, 6
    %v767 = vrot.slane %v539, 7
    %v768 = vperm.slane %v538, 0
    %v769 = vperm.slane %v754, 0
    %v770 = vperm.slane %v755, 0
    %v771 = vperm.slane %v756, 0
    %v772 = vperm.slane %v757, 0
    %v773 = vperm.slane %v758, 0
    %v774 = vperm.slane %v759, 0
    %v775 = vperm.slane %v760, 0
    %v776 = vperm.slane %v539, 0
    %v777 = vperm.slane %v761, 0
    %v778 = vperm.slane %v762, 0
    %v779 = vperm.slane %v763, 0
    %v780 = vperm.slane %v764, 0
    %v781 = vperm.slane %v765, 0
    %v782 = vperm.slane %v766, 0
    %v783 = vperm.slane %v767, 0
    %784 = vrot.lane.b32.xlu0 %v768, 112
    %v785 = vpop.permute.xlu0 %784
    %786 = vrot.lane.b32.xlu0 %v769, 112
    %v787 = vpop.permute.xlu0 %786
    %788 = vrot.lane.b32.xlu0 %v770, 112
    %v789 = vpop.permute.xlu0 %788
    %790 = vrot.lane.b32.xlu0 %v771, 112
    %v791 = vpop.permute.xlu0 %790
    %792 = vrot.lane.b32.xlu0 %v772, 112
    %v793 = vpop.permute.xlu0 %792
    %794 = vrot.lane.b32.xlu0 %v773, 112
    %v795 = vpop.permute.xlu0 %794
    %796 = vrot.lane.b32.xlu0 %v774, 112
    %v797 = vpop.permute.xlu0 %796
    %798 = vrot.lane.b32.xlu0 %v775, 112
    %v799 = vpop.permute.xlu0 %798
    %800 = vrot.lane.b32.xlu0 %v776, 112
    %v801 = vpop.permute.xlu0 %800
    %802 = vrot.lane.b32.xlu0 %v777, 112
    %v803 = vpop.permute.xlu0 %802
    %804 = vrot.lane.b32.xlu0 %v778, 112
    %v805 = vpop.permute.xlu0 %804
    %806 = vrot.lane.b32.xlu0 %v779, 112
    %v807 = vpop.permute.xlu0 %806
    %808 = vrot.lane.b32.xlu0 %v780, 112
    %v809 = vpop.permute.xlu0 %808
    %810 = vrot.lane.b32.xlu0 %v781, 112
    %v811 = vpop.permute.xlu0 %810
    %812 = vrot.lane.b32.xlu0 %v782, 112
    %v813 = vpop.permute.xlu0 %812
    %814 = vrot.lane.b32.xlu0 %v783, 112
    %v815 = vpop.permute.xlu0 %814
    %832 = vst.msk [vmem:[%s6 + $0x3] sm:$0x1] %vm188, %v785
    %833 = vst.msk [vmem:[%s6 + $0x13] sm:$0x1] %vm188, %v787
    %834 = vst.msk [vmem:[%s6 + $0x23] sm:$0x1] %vm188, %v789
    %835 = vst.msk [vmem:[%s6 + $0x33] sm:$0x1] %vm188, %v791
    %836 = vst.msk [vmem:[%s6 + $0x43] sm:$0x1] %vm188, %v793
    %837 = vst.msk [vmem:[%s6 + $0x53] sm:$0x1] %vm188, %v795
    %838 = vst.msk [vmem:[%s6 + $0x63] sm:$0x1] %vm188, %v797
    %839 = vst.msk [vmem:[%s6 + $0x73] sm:$0x1] %vm188, %v799
    %840 = vst.msk [vmem:[%s6 + $0x83] sm:$0x1] %vm188, %v801
    %841 = vst.msk [vmem:[%s6 + $0x93] sm:$0x1] %vm188, %v803
    %842 = vst.msk [vmem:[%s6 + $0xa3] sm:$0x1] %vm188, %v805
    %843 = vst.msk [vmem:[%s6 + $0xb3] sm:$0x1] %vm188, %v807
    %844 = vst.msk [vmem:[%s6 + $0xc3] sm:$0x1] %vm188, %v809
    %845 = vst.msk [vmem:[%s6 + $0xd3] sm:$0x1] %vm188, %v811
    %846 = vst.msk [vmem:[%s6 + $0xe3] sm:$0x1] %vm188, %v813
    %847 = vst.msk [vmem:[%s6 + $0xf3] sm:$0x1] %vm188, %v815
    %v848 = vrot.slane %v713, 1
    %v849 = vrot.slane %v713, 2
    %v850 = vrot.slane %v713, 3
    %v851 = vrot.slane %v713, 4
    %v852 = vrot.slane %v713, 5
    %v853 = vrot.slane %v713, 6
    %v854 = vrot.slane %v713, 7
    %v855 = vrot.slane %v714, 1
    %v856 = vrot.slane %v714, 2
    %v857 = vrot.slane %v714, 3
    %v858 = vrot.slane %v714, 4
    %v859 = vrot.slane %v714, 5
    %v860 = vrot.slane %v714, 6
    %v861 = vrot.slane %v714, 7
    %876 = vst.msk [vmem:[%s8 + $0x3] sm:$0x1] %vm233, %v713
    %877 = vst.msk [vmem:[%s8 + $0x13] sm:$0x1] %vm233, %v848
    %878 = vst.msk [vmem:[%s8 + $0x23] sm:$0x1] %vm233, %v849
    %879 = vst.msk [vmem:[%s8 + $0x33] sm:$0x1] %vm233, %v850
    %880 = vst.msk [vmem:[%s8 + $0x43] sm:$0x1] %vm233, %v851
    %881 = vst.msk [vmem:[%s8 + $0x53] sm:$0x1] %vm233, %v852
    %882 = vst.msk [vmem:[%s8 + $0x63] sm:$0x1] %vm233, %v853
    %883 = vst.msk [vmem:[%s8 + $0x73] sm:$0x1] %vm233, %v854
    %884 = vst.msk [vmem:[%s8 + $0x83] sm:$0x1] %vm233, %v714
    %885 = vst.msk [vmem:[%s8 + $0x93] sm:$0x1] %vm233, %v855
    %886 = vst.msk [vmem:[%s8 + $0xa3] sm:$0x1] %vm233, %v856
    %887 = vst.msk [vmem:[%s8 + $0xb3] sm:$0x1] %vm233, %v857
    %888 = vst.msk [vmem:[%s8 + $0xc3] sm:$0x1] %vm233, %v858
    %889 = vst.msk [vmem:[%s8 + $0xd3] sm:$0x1] %vm233, %v859
    %890 = vst.msk [vmem:[%s8 + $0xe3] sm:$0x1] %vm233, %v860
    %891 = vst.msk [vmem:[%s8 + $0xf3] sm:$0x1] %vm233, %v861
    %894 = vrot.lane.b32.xlu0 %v752, 112
    %v895 = vpop.permute.xlu0 %894
    %896 = vrot.lane.b32.xlu0 %v753, 112
    %v897 = vpop.permute.xlu0 %896
    %v898 = vsel %vm86, %v895, 0
    %v900 = vsel %vm86, %v897, 0
    %902 = vmatpush.msra.mxu0 0.0
    %903 = vmatpush.msra.mxu0 0.0
    %904 = vmatpush.msra.mxu0 0.0
    %905 = vmatpush.msra.mxu0 0.0
    %906 = vmatpush.msra.mxu0 0.0
    %907 = vmatpush.msra.mxu0 0.0
    %908 = vmatpush.msra.mxu0 0.0
    %909 = vmatpush.msra.mxu0 0.0
    %910 = vmatpush.msra.mxu0 0.0
    %911 = vmatpush.msra.mxu0 0.0
    %912 = vmatpush.msra.mxu0 0.0
    %913 = vmatpush.msra.mxu0 0.0
    %914 = vmatpush.msra.mxu0 %v77
    %915 = vmatpush.msra.mxu0 %v76
    %916 = vmatpush.msra.mxu0 %v75
    %917 = vmatpush.msra.mxu0 %v74
    %918 = vmatmul.f32.gmra.mxu0 %v898
    %v919 = vpop.f32.mrf.mxu0
    %v920 = vadd.f32 0.0, %v919
    %921 = vmatmul.f32.gmra.mxu0 %v900
    %v922 = vpop.f32.mrf.mxu0
    %v923 = vadd.f32 0.0, %v922
    %924 = vdwg.mxu0
    %v925 = vadd.f32 %v920, %v82
    %v926 = vadd.f32 %v923, %v82
    %v927 = vtanh.pop %v925
    %v928 = vtanh.pop %v926
    %v930 = vsel %vm120, %v927, 0
    %v933 = vsel %vm120, %v928, 0
    %935 = vmatpush.msra.mxu0 0.0
    %936 = vmatpush.msra.mxu0 0.0
    %937 = vmatpush.msra.mxu0 0.0
    %938 = vmatpush.msra.mxu0 0.0
    %939 = vmatpush.msra.mxu0 0.0
    %940 = vmatpush.msra.mxu0 0.0
    %941 = vmatpush.msra.mxu0 0.0
    %942 = vmatpush.msra.mxu0 0.0
    %943 = vmatpush.msra.mxu0 0.0
    %944 = vmatpush.msra.mxu0 0.0
    %945 = vmatpush.msra.mxu0 0.0
    %946 = vmatpush.msra.mxu0 0.0
    %947 = vmatpush.msra.mxu0 0.0
    %948 = vmatpush.msra.mxu0 0.0
    %949 = vmatpush.msra.mxu0 %v79
    %950 = vmatpush.msra.mxu0 %v78
    %951 = vmatmul.f32.gmra.mxu0 %v930
    %v952 = vpop.f32.mrf.mxu0
    %v953 = vadd.f32 0.0, %v952
    %954 = vmatmul.f32.gmra.mxu0 %v933
    %v955 = vpop.f32.mrf.mxu0
    %v956 = vadd.f32 0.0, %v955
    %957 = vdwg.mxu0
    %960 = vrot.lane.b32.xlu0 %v953, 16
    %v961 = vpop.permute.xlu0 %960
    %962 = vrot.lane.b32.xlu0 %v956, 16
    %v963 = vpop.permute.xlu0 %962
    %v966 = vadd.f32 %v920, %v961
    %v967 = vadd.f32 %v923, %v963
    %v968 = vrot.slane %v752, 1
    %v969 = vrot.slane %v752, 2
    %v970 = vrot.slane %v752, 3
    %v971 = vrot.slane %v752, 4
    %v972 = vrot.slane %v752, 5
    %v973 = vrot.slane %v752, 6
    %v974 = vrot.slane %v752, 7
    %v975 = vrot.slane %v753, 1
    %v976 = vrot.slane %v753, 2
    %v977 = vrot.slane %v753, 3
    %v978 = vrot.slane %v753, 4
    %v979 = vrot.slane %v753, 5
    %v980 = vrot.slane %v753, 6
    %v981 = vrot.slane %v753, 7
    %v982 = vperm.slane %v752, 0
    %v983 = vperm.slane %v968, 0
    %v984 = vperm.slane %v969, 0
    %v985 = vperm.slane %v970, 0
    %v986 = vperm.slane %v971, 0
    %v987 = vperm.slane %v972, 0
    %v988 = vperm.slane %v973, 0
    %v989 = vperm.slane %v974, 0
    %v990 = vperm.slane %v753, 0
    %v991 = vperm.slane %v975, 0
    %v992 = vperm.slane %v976, 0
    %v993 = vperm.slane %v977, 0
    %v994 = vperm.slane %v978, 0
    %v995 = vperm.slane %v979, 0
    %v996 = vperm.slane %v980, 0
    %v997 = vperm.slane %v981, 0
    %998 = vrot.lane.b32.xlu0 %v982, 112
    %v999 = vpop.permute.xlu0 %998
    %1000 = vrot.lane.b32.xlu0 %v983, 112
    %v1001 = vpop.permute.xlu0 %1000
    %1002 = vrot.lane.b32.xlu0 %v984, 112
    %v1003 = vpop.permute.xlu0 %1002
    %1004 = vrot.lane.b32.xlu0 %v985, 112
    %v1005 = vpop.permute.xlu0 %1004
    %1006 = vrot.lane.b32.xlu0 %v986, 112
    %v1007 = vpop.permute.xlu0 %1006
    %1008 = vrot.lane.b32.xlu0 %v987, 112
    %v1009 = vpop.permute.xlu0 %1008
    %1010 = vrot.lane.b32.xlu0 %v988, 112
    %v1011 = vpop.permute.xlu0 %1010
    %1012 = vrot.lane.b32.xlu0 %v989, 112
    %v1013 = vpop.permute.xlu0 %1012
    %1014 = vrot.lane.b32.xlu0 %v990, 112
    %v1015 = vpop.permute.xlu0 %1014
    %1016 = vrot.lane.b32.xlu0 %v991, 112
    %v1017 = vpop.permute.xlu0 %1016
    %1018 = vrot.lane.b32.xlu0 %v992, 112
    %v1019 = vpop.permute.xlu0 %1018
    %1020 = vrot.lane.b32.xlu0 %v993, 112
    %v1021 = vpop.permute.xlu0 %1020
    %1022 = vrot.lane.b32.xlu0 %v994, 112
    %v1023 = vpop.permute.xlu0 %1022
    %1024 = vrot.lane.b32.xlu0 %v995, 112
    %v1025 = vpop.permute.xlu0 %1024
    %1026 = vrot.lane.b32.xlu0 %v996, 112
    %v1027 = vpop.permute.xlu0 %1026
    %1028 = vrot.lane.b32.xlu0 %v997, 112
    %v1029 = vpop.permute.xlu0 %1028
    %1046 = vst.msk [vmem:[%s6 + $0x4] sm:$0x1] %vm188, %v999
    %1047 = vst.msk [vmem:[%s6 + $0x14] sm:$0x1] %vm188, %v1001
    %1048 = vst.msk [vmem:[%s6 + $0x24] sm:$0x1] %vm188, %v1003
    %1049 = vst.msk [vmem:[%s6 + $0x34] sm:$0x1] %vm188, %v1005
    %1050 = vst.msk [vmem:[%s6 + $0x44] sm:$0x1] %vm188, %v1007
    %1051 = vst.msk [vmem:[%s6 + $0x54] sm:$0x1] %vm188, %v1009
    %1052 = vst.msk [vmem:[%s6 + $0x64] sm:$0x1] %vm188, %v1011
    %1053 = vst.msk [vmem:[%s6 + $0x74] sm:$0x1] %vm188, %v1013
    %1054 = vst.msk [vmem:[%s6 + $0x84] sm:$0x1] %vm188, %v1015
    %1055 = vst.msk [vmem:[%s6 + $0x94] sm:$0x1] %vm188, %v1017
    %1056 = vst.msk [vmem:[%s6 + $0xa4] sm:$0x1] %vm188, %v1019
    %1057 = vst.msk [vmem:[%s6 + $0xb4] sm:$0x1] %vm188, %v1021
    %1058 = vst.msk [vmem:[%s6 + $0xc4] sm:$0x1] %vm188, %v1023
    %1059 = vst.msk [vmem:[%s6 + $0xd4] sm:$0x1] %vm188, %v1025
    %1060 = vst.msk [vmem:[%s6 + $0xe4] sm:$0x1] %vm188, %v1027
    %1061 = vst.msk [vmem:[%s6 + $0xf4] sm:$0x1] %vm188, %v1029
    %v1062 = vrot.slane %v927, 1
    %v1063 = vrot.slane %v927, 2
    %v1064 = vrot.slane %v927, 3
    %v1065 = vrot.slane %v927, 4
    %v1066 = vrot.slane %v927, 5
    %v1067 = vrot.slane %v927, 6
    %v1068 = vrot.slane %v927, 7
    %v1069 = vrot.slane %v928, 1
    %v1070 = vrot.slane %v928, 2
    %v1071 = vrot.slane %v928, 3
    %v1072 = vrot.slane %v928, 4
    %v1073 = vrot.slane %v928, 5
    %v1074 = vrot.slane %v928, 6
    %v1075 = vrot.slane %v928, 7
    %1090 = vst.msk [vmem:[%s8 + $0x4] sm:$0x1] %vm233, %v927
    %1091 = vst.msk [vmem:[%s8 + $0x14] sm:$0x1] %vm233, %v1062
    %1092 = vst.msk [vmem:[%s8 + $0x24] sm:$0x1] %vm233, %v1063
    %1093 = vst.msk [vmem:[%s8 + $0x34] sm:$0x1] %vm233, %v1064
    %1094 = vst.msk [vmem:[%s8 + $0x44] sm:$0x1] %vm233, %v1065
    %1095 = vst.msk [vmem:[%s8 + $0x54] sm:$0x1] %vm233, %v1066
    %1096 = vst.msk [vmem:[%s8 + $0x64] sm:$0x1] %vm233, %v1067
    %1097 = vst.msk [vmem:[%s8 + $0x74] sm:$0x1] %vm233, %v1068
    %1098 = vst.msk [vmem:[%s8 + $0x84] sm:$0x1] %vm233, %v928
    %1099 = vst.msk [vmem:[%s8 + $0x94] sm:$0x1] %vm233, %v1069
    %1100 = vst.msk [vmem:[%s8 + $0xa4] sm:$0x1] %vm233, %v1070
    %1101 = vst.msk [vmem:[%s8 + $0xb4] sm:$0x1] %vm233, %v1071
    %1102 = vst.msk [vmem:[%s8 + $0xc4] sm:$0x1] %vm233, %v1072
    %1103 = vst.msk [vmem:[%s8 + $0xd4] sm:$0x1] %vm233, %v1073
    %1104 = vst.msk [vmem:[%s8 + $0xe4] sm:$0x1] %vm233, %v1074
    %1105 = vst.msk [vmem:[%s8 + $0xf4] sm:$0x1] %vm233, %v1075
    %1108 = vrot.lane.b32.xlu0 %v966, 112
    %v1109 = vpop.permute.xlu0 %1108
    %1110 = vrot.lane.b32.xlu0 %v967, 112
    %v1111 = vpop.permute.xlu0 %1110
    %v1112 = vsel %vm86, %v1109, 0
    %v1114 = vsel %vm86, %v1111, 0
    %1116 = vmatpush.msra.mxu0 0.0
    %1117 = vmatpush.msra.mxu0 0.0
    %1118 = vmatpush.msra.mxu0 0.0
    %1119 = vmatpush.msra.mxu0 0.0
    %1120 = vmatpush.msra.mxu0 0.0
    %1121 = vmatpush.msra.mxu0 0.0
    %1122 = vmatpush.msra.mxu0 0.0
    %1123 = vmatpush.msra.mxu0 0.0
    %1124 = vmatpush.msra.mxu0 0.0
    %1125 = vmatpush.msra.mxu0 0.0
    %1126 = vmatpush.msra.mxu0 0.0
    %1127 = vmatpush.msra.mxu0 0.0
    %1128 = vmatpush.msra.mxu0 %v77
    %1129 = vmatpush.msra.mxu0 %v76
    %1130 = vmatpush.msra.mxu0 %v75
    %1131 = vmatpush.msra.mxu0 %v74
    %1132 = vmatmul.f32.gmra.mxu0 %v1112
    %v1133 = vpop.f32.mrf.mxu0
    %v1134 = vadd.f32 0.0, %v1133
    %1135 = vmatmul.f32.gmra.mxu0 %v1114
    %v1136 = vpop.f32.mrf.mxu0
    %v1137 = vadd.f32 0.0, %v1136
    %1138 = vdwg.mxu0
    %v1139 = vadd.f32 %v1134, %v82
    %v1140 = vadd.f32 %v1137, %v82
    %v1141 = vtanh.pop %v1139
    %v1142 = vtanh.pop %v1140
    %v1144 = vsel %vm120, %v1141, 0
    %v1147 = vsel %vm120, %v1142, 0
    %1149 = vmatpush.msra.mxu0 0.0
    %1150 = vmatpush.msra.mxu0 0.0
    %1151 = vmatpush.msra.mxu0 0.0
    %1152 = vmatpush.msra.mxu0 0.0
    %1153 = vmatpush.msra.mxu0 0.0
    %1154 = vmatpush.msra.mxu0 0.0
    %1155 = vmatpush.msra.mxu0 0.0
    %1156 = vmatpush.msra.mxu0 0.0
    %1157 = vmatpush.msra.mxu0 0.0
    %1158 = vmatpush.msra.mxu0 0.0
    %1159 = vmatpush.msra.mxu0 0.0
    %1160 = vmatpush.msra.mxu0 0.0
    %1161 = vmatpush.msra.mxu0 0.0
    %1162 = vmatpush.msra.mxu0 0.0
    %1163 = vmatpush.msra.mxu0 %v79
    %1164 = vmatpush.msra.mxu0 %v78
    %1165 = vmatmul.f32.gmra.mxu0 %v1144
    %v1166 = vpop.f32.mrf.mxu0
    %v1167 = vadd.f32 0.0, %v1166
    %1168 = vmatmul.f32.gmra.mxu0 %v1147
    %v1169 = vpop.f32.mrf.mxu0
    %v1170 = vadd.f32 0.0, %v1169
    %1171 = vdwg.mxu0
    %1174 = vrot.lane.b32.xlu0 %v1167, 16
    %v1175 = vpop.permute.xlu0 %1174
    %1176 = vrot.lane.b32.xlu0 %v1170, 16
    %v1177 = vpop.permute.xlu0 %1176
    %v1180 = vadd.f32 %v1134, %v1175
    %v1181 = vadd.f32 %v1137, %v1177
    %v1182 = vrot.slane %v966, 1
    %v1183 = vrot.slane %v966, 2
    %v1184 = vrot.slane %v966, 3
    %v1185 = vrot.slane %v966, 4
    %v1186 = vrot.slane %v966, 5
    %v1187 = vrot.slane %v966, 6
    %v1188 = vrot.slane %v966, 7
    %v1189 = vrot.slane %v967, 1
    %v1190 = vrot.slane %v967, 2
    %v1191 = vrot.slane %v967, 3
    %v1192 = vrot.slane %v967, 4
    %v1193 = vrot.slane %v967, 5
    %v1194 = vrot.slane %v967, 6
    %v1195 = vrot.slane %v967, 7
    %v1196 = vperm.slane %v966, 0
    %v1197 = vperm.slane %v1182, 0
    %v1198 = vperm.slane %v1183, 0
    %v1199 = vperm.slane %v1184, 0
    %v1200 = vperm.slane %v1185, 0
    %v1201 = vperm.slane %v1186, 0
    %v1202 = vperm.slane %v1187, 0
    %v1203 = vperm.slane %v1188, 0
    %v1204 = vperm.slane %v967, 0
    %v1205 = vperm.slane %v1189, 0
    %v1206 = vperm.slane %v1190, 0
    %v1207 = vperm.slane %v1191, 0
    %v1208 = vperm.slane %v1192, 0
    %v1209 = vperm.slane %v1193, 0
    %v1210 = vperm.slane %v1194, 0
    %v1211 = vperm.slane %v1195, 0
    %1212 = vrot.lane.b32.xlu0 %v1196, 112
    %v1213 = vpop.permute.xlu0 %1212
    %1214 = vrot.lane.b32.xlu0 %v1197, 112
    %v1215 = vpop.permute.xlu0 %1214
    %1216 = vrot.lane.b32.xlu0 %v1198, 112
    %v1217 = vpop.permute.xlu0 %1216
    %1218 = vrot.lane.b32.xlu0 %v1199, 112
    %v1219 = vpop.permute.xlu0 %1218
    %1220 = vrot.lane.b32.xlu0 %v1200, 112
    %v1221 = vpop.permute.xlu0 %1220
    %1222 = vrot.lane.b32.xlu0 %v1201, 112
    %v1223 = vpop.permute.xlu0 %1222
    %1224 = vrot.lane.b32.xlu0 %v1202, 112
    %v1225 = vpop.permute.xlu0 %1224
    %1226 = vrot.lane.b32.xlu0 %v1203, 112
    %v1227 = vpop.permute.xlu0 %1226
    %1228 = vrot.lane.b32.xlu0 %v1204, 112
    %v1229 = vpop.permute.xlu0 %1228
    %1230 = vrot.lane.b32.xlu0 %v1205, 112
    %v1231 = vpop.permute.xlu0 %1230
    %1232 = vrot.lane.b32.xlu0 %v1206, 112
    %v1233 = vpop.permute.xlu0 %1232
    %1234 = vrot.lane.b32.xlu0 %v1207, 112
    %v1235 = vpop.permute.xlu0 %1234
    %1236 = vrot.lane.b32.xlu0 %v1208, 112
    %v1237 = vpop.permute.xlu0 %1236
    %1238 = vrot.lane.b32.xlu0 %v1209, 112
    %v1239 = vpop.permute.xlu0 %1238
    %1240 = vrot.lane.b32.xlu0 %v1210, 112
    %v1241 = vpop.permute.xlu0 %1240
    %1242 = vrot.lane.b32.xlu0 %v1211, 112
    %v1243 = vpop.permute.xlu0 %1242
    %1260 = vst.msk [vmem:[%s6 + $0x5] sm:$0x1] %vm188, %v1213
    %1261 = vst.msk [vmem:[%s6 + $0x15] sm:$0x1] %vm188, %v1215
    %1262 = vst.msk [vmem:[%s6 + $0x25] sm:$0x1] %vm188, %v1217
    %1263 = vst.msk [vmem:[%s6 + $0x35] sm:$0x1] %vm188, %v1219
    %1264 = vst.msk [vmem:[%s6 + $0x45] sm:$0x1] %vm188, %v1221
    %1265 = vst.msk [vmem:[%s6 + $0x55] sm:$0x1] %vm188, %v1223
    %1266 = vst.msk [vmem:[%s6 + $0x65] sm:$0x1] %vm188, %v1225
    %1267 = vst.msk [vmem:[%s6 + $0x75] sm:$0x1] %vm188, %v1227
    %1268 = vst.msk [vmem:[%s6 + $0x85] sm:$0x1] %vm188, %v1229
    %1269 = vst.msk [vmem:[%s6 + $0x95] sm:$0x1] %vm188, %v1231
    %1270 = vst.msk [vmem:[%s6 + $0xa5] sm:$0x1] %vm188, %v1233
    %1271 = vst.msk [vmem:[%s6 + $0xb5] sm:$0x1] %vm188, %v1235
    %1272 = vst.msk [vmem:[%s6 + $0xc5] sm:$0x1] %vm188, %v1237
    %1273 = vst.msk [vmem:[%s6 + $0xd5] sm:$0x1] %vm188, %v1239
    %1274 = vst.msk [vmem:[%s6 + $0xe5] sm:$0x1] %vm188, %v1241
    %1275 = vst.msk [vmem:[%s6 + $0xf5] sm:$0x1] %vm188, %v1243
    %v1276 = vrot.slane %v1141, 1
    %v1277 = vrot.slane %v1141, 2
    %v1278 = vrot.slane %v1141, 3
    %v1279 = vrot.slane %v1141, 4
    %v1280 = vrot.slane %v1141, 5
    %v1281 = vrot.slane %v1141, 6
    %v1282 = vrot.slane %v1141, 7
    %v1283 = vrot.slane %v1142, 1
    %v1284 = vrot.slane %v1142, 2
    %v1285 = vrot.slane %v1142, 3
    %v1286 = vrot.slane %v1142, 4
    %v1287 = vrot.slane %v1142, 5
    %v1288 = vrot.slane %v1142, 6
    %v1289 = vrot.slane %v1142, 7
    %1304 = vst.msk [vmem:[%s8 + $0x5] sm:$0x1] %vm233, %v1141
    %1305 = vst.msk [vmem:[%s8 + $0x15] sm:$0x1] %vm233, %v1276
    %1306 = vst.msk [vmem:[%s8 + $0x25] sm:$0x1] %vm233, %v1277
    %1307 = vst.msk [vmem:[%s8 + $0x35] sm:$0x1] %vm233, %v1278
    %1308 = vst.msk [vmem:[%s8 + $0x45] sm:$0x1] %vm233, %v1279
    %1309 = vst.msk [vmem:[%s8 + $0x55] sm:$0x1] %vm233, %v1280
    %1310 = vst.msk [vmem:[%s8 + $0x65] sm:$0x1] %vm233, %v1281
    %1311 = vst.msk [vmem:[%s8 + $0x75] sm:$0x1] %vm233, %v1282
    %1312 = vst.msk [vmem:[%s8 + $0x85] sm:$0x1] %vm233, %v1142
    %1313 = vst.msk [vmem:[%s8 + $0x95] sm:$0x1] %vm233, %v1283
    %1314 = vst.msk [vmem:[%s8 + $0xa5] sm:$0x1] %vm233, %v1284
    %1315 = vst.msk [vmem:[%s8 + $0xb5] sm:$0x1] %vm233, %v1285
    %1316 = vst.msk [vmem:[%s8 + $0xc5] sm:$0x1] %vm233, %v1286
    %1317 = vst.msk [vmem:[%s8 + $0xd5] sm:$0x1] %vm233, %v1287
    %1318 = vst.msk [vmem:[%s8 + $0xe5] sm:$0x1] %vm233, %v1288
    %1319 = vst.msk [vmem:[%s8 + $0xf5] sm:$0x1] %vm233, %v1289
    %1322 = vrot.lane.b32.xlu0 %v1180, 112
    %v1323 = vpop.permute.xlu0 %1322
    %1324 = vrot.lane.b32.xlu0 %v1181, 112
    %v1325 = vpop.permute.xlu0 %1324
    %v1326 = vsel %vm86, %v1323, 0
    %v1328 = vsel %vm86, %v1325, 0
    %1330 = vmatpush.msra.mxu0 0.0
    %1331 = vmatpush.msra.mxu0 0.0
    %1332 = vmatpush.msra.mxu0 0.0
    %1333 = vmatpush.msra.mxu0 0.0
    %1334 = vmatpush.msra.mxu0 0.0
    %1335 = vmatpush.msra.mxu0 0.0
    %1336 = vmatpush.msra.mxu0 0.0
    %1337 = vmatpush.msra.mxu0 0.0
    %1338 = vmatpush.msra.mxu0 0.0
    %1339 = vmatpush.msra.mxu0 0.0
    %1340 = vmatpush.msra.mxu0 0.0
    %1341 = vmatpush.msra.mxu0 0.0
    %1342 = vmatpush.msra.mxu0 %v77
    %1343 = vmatpush.msra.mxu0 %v76
    %1344 = vmatpush.msra.mxu0 %v75
    %1345 = vmatpush.msra.mxu0 %v74
    %1346 = vmatmul.f32.gmra.mxu0 %v1326
    %v1347 = vpop.f32.mrf.mxu0
    %v1348 = vadd.f32 0.0, %v1347
    %1349 = vmatmul.f32.gmra.mxu0 %v1328
    %v1350 = vpop.f32.mrf.mxu0
    %v1351 = vadd.f32 0.0, %v1350
    %1352 = vdwg.mxu0
    %v1353 = vadd.f32 %v1348, %v82
    %v1354 = vadd.f32 %v1351, %v82
    %v1355 = vtanh.pop %v1353
    %v1356 = vtanh.pop %v1354
    %v1358 = vsel %vm120, %v1355, 0
    %v1361 = vsel %vm120, %v1356, 0
    %1363 = vmatpush.msra.mxu0 0.0
    %1364 = vmatpush.msra.mxu0 0.0
    %1365 = vmatpush.msra.mxu0 0.0
    %1366 = vmatpush.msra.mxu0 0.0
    %1367 = vmatpush.msra.mxu0 0.0
    %1368 = vmatpush.msra.mxu0 0.0
    %1369 = vmatpush.msra.mxu0 0.0
    %1370 = vmatpush.msra.mxu0 0.0
    %1371 = vmatpush.msra.mxu0 0.0
    %1372 = vmatpush.msra.mxu0 0.0
    %1373 = vmatpush.msra.mxu0 0.0
    %1374 = vmatpush.msra.mxu0 0.0
    %1375 = vmatpush.msra.mxu0 0.0
    %1376 = vmatpush.msra.mxu0 0.0
    %1377 = vmatpush.msra.mxu0 %v79
    %1378 = vmatpush.msra.mxu0 %v78
    %1379 = vmatmul.f32.gmra.mxu0 %v1358
    %v1380 = vpop.f32.mrf.mxu0
    %v1381 = vadd.f32 0.0, %v1380
    %1382 = vmatmul.f32.gmra.mxu0 %v1361
    %v1383 = vpop.f32.mrf.mxu0
    %v1384 = vadd.f32 0.0, %v1383
    %1385 = vdwg.mxu0
    %1388 = vrot.lane.b32.xlu0 %v1381, 16
    %v1389 = vpop.permute.xlu0 %1388
    %1390 = vrot.lane.b32.xlu0 %v1384, 16
    %v1391 = vpop.permute.xlu0 %1390
    %v1394 = vadd.f32 %v1348, %v1389
    %v1395 = vadd.f32 %v1351, %v1391
    %v1396 = vrot.slane %v1180, 1
    %v1397 = vrot.slane %v1180, 2
    %v1398 = vrot.slane %v1180, 3
    %v1399 = vrot.slane %v1180, 4
    %v1400 = vrot.slane %v1180, 5
    %v1401 = vrot.slane %v1180, 6
    %v1402 = vrot.slane %v1180, 7
    %v1403 = vrot.slane %v1181, 1
    %v1404 = vrot.slane %v1181, 2
    %v1405 = vrot.slane %v1181, 3
    %v1406 = vrot.slane %v1181, 4
    %v1407 = vrot.slane %v1181, 5
    %v1408 = vrot.slane %v1181, 6
    %v1409 = vrot.slane %v1181, 7
    %v1410 = vperm.slane %v1180, 0
    %v1411 = vperm.slane %v1396, 0
    %v1412 = vperm.slane %v1397, 0
    %v1413 = vperm.slane %v1398, 0
    %v1414 = vperm.slane %v1399, 0
    %v1415 = vperm.slane %v1400, 0
    %v1416 = vperm.slane %v1401, 0
    %v1417 = vperm.slane %v1402, 0
    %v1418 = vperm.slane %v1181, 0
    %v1419 = vperm.slane %v1403, 0
    %v1420 = vperm.slane %v1404, 0
    %v1421 = vperm.slane %v1405, 0
    %v1422 = vperm.slane %v1406, 0
    %v1423 = vperm.slane %v1407, 0
    %v1424 = vperm.slane %v1408, 0
    %v1425 = vperm.slane %v1409, 0
    %1426 = vrot.lane.b32.xlu0 %v1410, 112
    %v1427 = vpop.permute.xlu0 %1426
    %1428 = vrot.lane.b32.xlu0 %v1411, 112
    %v1429 = vpop.permute.xlu0 %1428
    %1430 = vrot.lane.b32.xlu0 %v1412, 112
    %v1431 = vpop.permute.xlu0 %1430
    %1432 = vrot.lane.b32.xlu0 %v1413, 112
    %v1433 = vpop.permute.xlu0 %1432
    %1434 = vrot.lane.b32.xlu0 %v1414, 112
    %v1435 = vpop.permute.xlu0 %1434
    %1436 = vrot.lane.b32.xlu0 %v1415, 112
    %v1437 = vpop.permute.xlu0 %1436
    %1438 = vrot.lane.b32.xlu0 %v1416, 112
    %v1439 = vpop.permute.xlu0 %1438
    %1440 = vrot.lane.b32.xlu0 %v1417, 112
    %v1441 = vpop.permute.xlu0 %1440
    %1442 = vrot.lane.b32.xlu0 %v1418, 112
    %v1443 = vpop.permute.xlu0 %1442
    %1444 = vrot.lane.b32.xlu0 %v1419, 112
    %v1445 = vpop.permute.xlu0 %1444
    %1446 = vrot.lane.b32.xlu0 %v1420, 112
    %v1447 = vpop.permute.xlu0 %1446
    %1448 = vrot.lane.b32.xlu0 %v1421, 112
    %v1449 = vpop.permute.xlu0 %1448
    %1450 = vrot.lane.b32.xlu0 %v1422, 112
    %v1451 = vpop.permute.xlu0 %1450
    %1452 = vrot.lane.b32.xlu0 %v1423, 112
    %v1453 = vpop.permute.xlu0 %1452
    %1454 = vrot.lane.b32.xlu0 %v1424, 112
    %v1455 = vpop.permute.xlu0 %1454
    %1456 = vrot.lane.b32.xlu0 %v1425, 112
    %v1457 = vpop.permute.xlu0 %1456
    %1474 = vst.msk [vmem:[%s6 + $0x6] sm:$0x1] %vm188, %v1427
    %1475 = vst.msk [vmem:[%s6 + $0x16] sm:$0x1] %vm188, %v1429
    %1476 = vst.msk [vmem:[%s6 + $0x26] sm:$0x1] %vm188, %v1431
    %1477 = vst.msk [vmem:[%s6 + $0x36] sm:$0x1] %vm188, %v1433
    %1478 = vst.msk [vmem:[%s6 + $0x46] sm:$0x1] %vm188, %v1435
    %1479 = vst.msk [vmem:[%s6 + $0x56] sm:$0x1] %vm188, %v1437
    %1480 = vst.msk [vmem:[%s6 + $0x66] sm:$0x1] %vm188, %v1439
    %1481 = vst.msk [vmem:[%s6 + $0x76] sm:$0x1] %vm188, %v1441
    %1482 = vst.msk [vmem:[%s6 + $0x86] sm:$0x1] %vm188, %v1443
    %1483 = vst.msk [vmem:[%s6 + $0x96] sm:$0x1] %vm188, %v1445
    %1484 = vst.msk [vmem:[%s6 + $0xa6] sm:$0x1] %vm188, %v1447
    %1485 = vst.msk [vmem:[%s6 + $0xb6] sm:$0x1] %vm188, %v1449
    %1486 = vst.msk [vmem:[%s6 + $0xc6] sm:$0x1] %vm188, %v1451
    %1487 = vst.msk [vmem:[%s6 + $0xd6] sm:$0x1] %vm188, %v1453
    %1488 = vst.msk [vmem:[%s6 + $0xe6] sm:$0x1] %vm188, %v1455
    %1489 = vst.msk [vmem:[%s6 + $0xf6] sm:$0x1] %vm188, %v1457
    %v1490 = vrot.slane %v1355, 1
    %v1491 = vrot.slane %v1355, 2
    %v1492 = vrot.slane %v1355, 3
    %v1493 = vrot.slane %v1355, 4
    %v1494 = vrot.slane %v1355, 5
    %v1495 = vrot.slane %v1355, 6
    %v1496 = vrot.slane %v1355, 7
    %v1497 = vrot.slane %v1356, 1
    %v1498 = vrot.slane %v1356, 2
    %v1499 = vrot.slane %v1356, 3
    %v1500 = vrot.slane %v1356, 4
    %v1501 = vrot.slane %v1356, 5
    %v1502 = vrot.slane %v1356, 6
    %v1503 = vrot.slane %v1356, 7
    %1518 = vst.msk [vmem:[%s8 + $0x6] sm:$0x1] %vm233, %v1355
    %1519 = vst.msk [vmem:[%s8 + $0x16] sm:$0x1] %vm233, %v1490
    %1520 = vst.msk [vmem:[%s8 + $0x26] sm:$0x1] %vm233, %v1491
    %1521 = vst.msk [vmem:[%s8 + $0x36] sm:$0x1] %vm233, %v1492
    %1522 = vst.msk [vmem:[%s8 + $0x46] sm:$0x1] %vm233, %v1493
    %1523 = vst.msk [vmem:[%s8 + $0x56] sm:$0x1] %vm233, %v1494
    %1524 = vst.msk [vmem:[%s8 + $0x66] sm:$0x1] %vm233, %v1495
    %1525 = vst.msk [vmem:[%s8 + $0x76] sm:$0x1] %vm233, %v1496
    %1526 = vst.msk [vmem:[%s8 + $0x86] sm:$0x1] %vm233, %v1356
    %1527 = vst.msk [vmem:[%s8 + $0x96] sm:$0x1] %vm233, %v1497
    %1528 = vst.msk [vmem:[%s8 + $0xa6] sm:$0x1] %vm233, %v1498
    %1529 = vst.msk [vmem:[%s8 + $0xb6] sm:$0x1] %vm233, %v1499
    %1530 = vst.msk [vmem:[%s8 + $0xc6] sm:$0x1] %vm233, %v1500
    %1531 = vst.msk [vmem:[%s8 + $0xd6] sm:$0x1] %vm233, %v1501
    %1532 = vst.msk [vmem:[%s8 + $0xe6] sm:$0x1] %vm233, %v1502
    %1533 = vst.msk [vmem:[%s8 + $0xf6] sm:$0x1] %vm233, %v1503
    %1536 = vrot.lane.b32.xlu0 %v1394, 112
    %v1537 = vpop.permute.xlu0 %1536
    %1538 = vrot.lane.b32.xlu0 %v1395, 112
    %v1539 = vpop.permute.xlu0 %1538
    %v1540 = vsel %vm86, %v1537, 0
    %v1542 = vsel %vm86, %v1539, 0
    %1544 = vmatpush.msra.mxu0 0.0
    %1545 = vmatpush.msra.mxu0 0.0
    %1546 = vmatpush.msra.mxu0 0.0
    %1547 = vmatpush.msra.mxu0 0.0
    %1548 = vmatpush.msra.mxu0 0.0
    %1549 = vmatpush.msra.mxu0 0.0
    %1550 = vmatpush.msra.mxu0 0.0
    %1551 = vmatpush.msra.mxu0 0.0
    %1552 = vmatpush.msra.mxu0 0.0
    %1553 = vmatpush.msra.mxu0 0.0
    %1554 = vmatpush.msra.mxu0 0.0
    %1555 = vmatpush.msra.mxu0 0.0
    %1556 = vmatpush.msra.mxu0 %v77
    %1557 = vmatpush.msra.mxu0 %v76
    %1558 = vmatpush.msra.mxu0 %v75
    %1559 = vmatpush.msra.mxu0 %v74
    %1560 = vmatmul.f32.gmra.mxu0 %v1540
    %v1561 = vpop.f32.mrf.mxu0
    %v1562 = vadd.f32 0.0, %v1561
    %1563 = vmatmul.f32.gmra.mxu0 %v1542
    %v1564 = vpop.f32.mrf.mxu0
    %v1565 = vadd.f32 0.0, %v1564
    %1566 = vdwg.mxu0
    %v1567 = vadd.f32 %v1562, %v82
    %v1568 = vadd.f32 %v1565, %v82
    %v1569 = vtanh.pop %v1567
    %v1570 = vtanh.pop %v1568
    %v1572 = vsel %vm120, %v1569, 0
    %v1575 = vsel %vm120, %v1570, 0
    %1577 = vmatpush.msra.mxu0 0.0
    %1578 = vmatpush.msra.mxu0 0.0
    %1579 = vmatpush.msra.mxu0 0.0
    %1580 = vmatpush.msra.mxu0 0.0
    %1581 = vmatpush.msra.mxu0 0.0
    %1582 = vmatpush.msra.mxu0 0.0
    %1583 = vmatpush.msra.mxu0 0.0
    %1584 = vmatpush.msra.mxu0 0.0
    %1585 = vmatpush.msra.mxu0 0.0
    %1586 = vmatpush.msra.mxu0 0.0
    %1587 = vmatpush.msra.mxu0 0.0
    %1588 = vmatpush.msra.mxu0 0.0
    %1589 = vmatpush.msra.mxu0 0.0
    %1590 = vmatpush.msra.mxu0 0.0
    %1591 = vmatpush.msra.mxu0 %v79
    %1592 = vmatpush.msra.mxu0 %v78
    %1593 = vmatmul.f32.gmra.mxu0 %v1572
    %v1594 = vpop.f32.mrf.mxu0
    %v1595 = vadd.f32 0.0, %v1594
    %1596 = vmatmul.f32.gmra.mxu0 %v1575
    %v1597 = vpop.f32.mrf.mxu0
    %v1598 = vadd.f32 0.0, %v1597
    %1599 = vdwg.mxu0
    %1602 = vrot.lane.b32.xlu0 %v1595, 16
    %v1603 = vpop.permute.xlu0 %1602
    %1604 = vrot.lane.b32.xlu0 %v1598, 16
    %v1605 = vpop.permute.xlu0 %1604
    %v1608 = vadd.f32 %v1562, %v1603
    %v1609 = vadd.f32 %v1565, %v1605
    %v1610 = vrot.slane %v1394, 1
    %v1611 = vrot.slane %v1394, 2
    %v1612 = vrot.slane %v1394, 3
    %v1613 = vrot.slane %v1394, 4
    %v1614 = vrot.slane %v1394, 5
    %v1615 = vrot.slane %v1394, 6
    %v1616 = vrot.slane %v1394, 7
    %v1617 = vrot.slane %v1395, 1
    %v1618 = vrot.slane %v1395, 2
    %v1619 = vrot.slane %v1395, 3
    %v1620 = vrot.slane %v1395, 4
    %v1621 = vrot.slane %v1395, 5
    %v1622 = vrot.slane %v1395, 6
    %v1623 = vrot.slane %v1395, 7
    %v1624 = vperm.slane %v1394, 0
    %v1625 = vperm.slane %v1610, 0
    %v1626 = vperm.slane %v1611, 0
    %v1627 = vperm.slane %v1612, 0
    %v1628 = vperm.slane %v1613, 0
    %v1629 = vperm.slane %v1614, 0
    %v1630 = vperm.slane %v1615, 0
    %v1631 = vperm.slane %v1616, 0
    %v1632 = vperm.slane %v1395, 0
    %v1633 = vperm.slane %v1617, 0
    %v1634 = vperm.slane %v1618, 0
    %v1635 = vperm.slane %v1619, 0
    %v1636 = vperm.slane %v1620, 0
    %v1637 = vperm.slane %v1621, 0
    %v1638 = vperm.slane %v1622, 0
    %v1639 = vperm.slane %v1623, 0
    %1640 = vrot.lane.b32.xlu0 %v1624, 112
    %v1641 = vpop.permute.xlu0 %1640
    %1642 = vrot.lane.b32.xlu0 %v1625, 112
    %v1643 = vpop.permute.xlu0 %1642
    %1644 = vrot.lane.b32.xlu0 %v1626, 112
    %v1645 = vpop.permute.xlu0 %1644
    %1646 = vrot.lane.b32.xlu0 %v1627, 112
    %v1647 = vpop.permute.xlu0 %1646
    %1648 = vrot.lane.b32.xlu0 %v1628, 112
    %v1649 = vpop.permute.xlu0 %1648
    %1650 = vrot.lane.b32.xlu0 %v1629, 112
    %v1651 = vpop.permute.xlu0 %1650
    %1652 = vrot.lane.b32.xlu0 %v1630, 112
    %v1653 = vpop.permute.xlu0 %1652
    %1654 = vrot.lane.b32.xlu0 %v1631, 112
    %v1655 = vpop.permute.xlu0 %1654
    %1656 = vrot.lane.b32.xlu0 %v1632, 112
    %v1657 = vpop.permute.xlu0 %1656
    %1658 = vrot.lane.b32.xlu0 %v1633, 112
    %v1659 = vpop.permute.xlu0 %1658
    %1660 = vrot.lane.b32.xlu0 %v1634, 112
    %v1661 = vpop.permute.xlu0 %1660
    %1662 = vrot.lane.b32.xlu0 %v1635, 112
    %v1663 = vpop.permute.xlu0 %1662
    %1664 = vrot.lane.b32.xlu0 %v1636, 112
    %v1665 = vpop.permute.xlu0 %1664
    %1666 = vrot.lane.b32.xlu0 %v1637, 112
    %v1667 = vpop.permute.xlu0 %1666
    %1668 = vrot.lane.b32.xlu0 %v1638, 112
    %v1669 = vpop.permute.xlu0 %1668
    %1670 = vrot.lane.b32.xlu0 %v1639, 112
    %v1671 = vpop.permute.xlu0 %1670
    %1688 = vst.msk [vmem:[%s6 + $0x7] sm:$0x1] %vm188, %v1641
    %1689 = vst.msk [vmem:[%s6 + $0x17] sm:$0x1] %vm188, %v1643
    %1690 = vst.msk [vmem:[%s6 + $0x27] sm:$0x1] %vm188, %v1645
    %1691 = vst.msk [vmem:[%s6 + $0x37] sm:$0x1] %vm188, %v1647
    %1692 = vst.msk [vmem:[%s6 + $0x47] sm:$0x1] %vm188, %v1649
    %1693 = vst.msk [vmem:[%s6 + $0x57] sm:$0x1] %vm188, %v1651
    %1694 = vst.msk [vmem:[%s6 + $0x67] sm:$0x1] %vm188, %v1653
    %1695 = vst.msk [vmem:[%s6 + $0x77] sm:$0x1] %vm188, %v1655
    %1696 = vst.msk [vmem:[%s6 + $0x87] sm:$0x1] %vm188, %v1657
    %1697 = vst.msk [vmem:[%s6 + $0x97] sm:$0x1] %vm188, %v1659
    %1698 = vst.msk [vmem:[%s6 + $0xa7] sm:$0x1] %vm188, %v1661
    %1699 = vst.msk [vmem:[%s6 + $0xb7] sm:$0x1] %vm188, %v1663
    %1700 = vst.msk [vmem:[%s6 + $0xc7] sm:$0x1] %vm188, %v1665
    %1701 = vst.msk [vmem:[%s6 + $0xd7] sm:$0x1] %vm188, %v1667
    %1702 = vst.msk [vmem:[%s6 + $0xe7] sm:$0x1] %vm188, %v1669
    %1703 = vst.msk [vmem:[%s6 + $0xf7] sm:$0x1] %vm188, %v1671
    %v1704 = vrot.slane %v1569, 1
    %v1705 = vrot.slane %v1569, 2
    %v1706 = vrot.slane %v1569, 3
    %v1707 = vrot.slane %v1569, 4
    %v1708 = vrot.slane %v1569, 5
    %v1709 = vrot.slane %v1569, 6
    %v1710 = vrot.slane %v1569, 7
    %v1711 = vrot.slane %v1570, 1
    %v1712 = vrot.slane %v1570, 2
    %v1713 = vrot.slane %v1570, 3
    %v1714 = vrot.slane %v1570, 4
    %v1715 = vrot.slane %v1570, 5
    %v1716 = vrot.slane %v1570, 6
    %v1717 = vrot.slane %v1570, 7
    %1732 = vst.msk [vmem:[%s8 + $0x7] sm:$0x1] %vm233, %v1569
    %1733 = vst.msk [vmem:[%s8 + $0x17] sm:$0x1] %vm233, %v1704
    %1734 = vst.msk [vmem:[%s8 + $0x27] sm:$0x1] %vm233, %v1705
    %1735 = vst.msk [vmem:[%s8 + $0x37] sm:$0x1] %vm233, %v1706
    %1736 = vst.msk [vmem:[%s8 + $0x47] sm:$0x1] %vm233, %v1707
    %1737 = vst.msk [vmem:[%s8 + $0x57] sm:$0x1] %vm233, %v1708
    %1738 = vst.msk [vmem:[%s8 + $0x67] sm:$0x1] %vm233, %v1709
    %1739 = vst.msk [vmem:[%s8 + $0x77] sm:$0x1] %vm233, %v1710
    %1740 = vst.msk [vmem:[%s8 + $0x87] sm:$0x1] %vm233, %v1570
    %1741 = vst.msk [vmem:[%s8 + $0x97] sm:$0x1] %vm233, %v1711
    %1742 = vst.msk [vmem:[%s8 + $0xa7] sm:$0x1] %vm233, %v1712
    %1743 = vst.msk [vmem:[%s8 + $0xb7] sm:$0x1] %vm233, %v1713
    %1744 = vst.msk [vmem:[%s8 + $0xc7] sm:$0x1] %vm233, %v1714
    %1745 = vst.msk [vmem:[%s8 + $0xd7] sm:$0x1] %vm233, %v1715
    %1746 = vst.msk [vmem:[%s8 + $0xe7] sm:$0x1] %vm233, %v1716
    %1747 = vst.msk [vmem:[%s8 + $0xf7] sm:$0x1] %vm233, %v1717
    %1750 = vrot.lane.b32.xlu0 %v1608, 112
    %v1751 = vpop.permute.xlu0 %1750
    %1752 = vrot.lane.b32.xlu0 %v1609, 112
    %v1753 = vpop.permute.xlu0 %1752
    %v1754 = vsel %vm86, %v1751, 0
    %v1756 = vsel %vm86, %v1753, 0
    %1758 = vmatpush.msra.mxu0 0.0
    %1759 = vmatpush.msra.mxu0 0.0
    %1760 = vmatpush.msra.mxu0 0.0
    %1761 = vmatpush.msra.mxu0 0.0
    %1762 = vmatpush.msra.mxu0 0.0
    %1763 = vmatpush.msra.mxu0 0.0
    %1764 = vmatpush.msra.mxu0 0.0
    %1765 = vmatpush.msra.mxu0 0.0
    %1766 = vmatpush.msra.mxu0 0.0
    %1767 = vmatpush.msra.mxu0 0.0
    %1768 = vmatpush.msra.mxu0 0.0
    %1769 = vmatpush.msra.mxu0 0.0
    %1770 = vmatpush.msra.mxu0 %v77
    %1771 = vmatpush.msra.mxu0 %v76
    %1772 = vmatpush.msra.mxu0 %v75
    %1773 = vmatpush.msra.mxu0 %v74
    %1774 = vmatmul.f32.gmra.mxu0 %v1754
    %v1775 = vpop.f32.mrf.mxu0
    %v1776 = vadd.f32 %v82, %v1775
    %1777 = vmatmul.f32.gmra.mxu0 %v1756
    %v1778 = vpop.f32.mrf.mxu0
    %v1779 = vadd.f32 %v82, %v1778
    %1780 = vdwg.mxu0
    %v1781 = vtanh.pop %v1776
    %v1782 = vtanh.pop %v1779
    %v1783 = vrot.slane %v1608, 1
    %v1784 = vrot.slane %v1608, 2
    %v1785 = vrot.slane %v1608, 3
    %v1786 = vrot.slane %v1608, 4
    %v1787 = vrot.slane %v1608, 5
    %v1788 = vrot.slane %v1608, 6
    %v1789 = vrot.slane %v1608, 7
    %v1790 = vrot.slane %v1609, 1
    %v1791 = vrot.slane %v1609, 2
    %v1792 = vrot.slane %v1609, 3
    %v1793 = vrot.slane %v1609, 4
    %v1794 = vrot.slane %v1609, 5
    %v1795 = vrot.slane %v1609, 6
    %v1796 = vrot.slane %v1609, 7
    %v1797 = vperm.slane %v1608, 0
    %v1798 = vperm.slane %v1783, 0
    %v1799 = vperm.slane %v1784, 0
    %v1800 = vperm.slane %v1785, 0
    %v1801 = vperm.slane %v1786, 0
    %v1802 = vperm.slane %v1787, 0
    %v1803 = vperm.slane %v1788, 0
    %v1804 = vperm.slane %v1789, 0
    %v1805 = vperm.slane %v1609, 0
    %v1806 = vperm.slane %v1790, 0
    %v1807 = vperm.slane %v1791, 0
    %v1808 = vperm.slane %v1792, 0
    %v1809 = vperm.slane %v1793, 0
    %v1810 = vperm.slane %v1794, 0
    %v1811 = vperm.slane %v1795, 0
    %v1812 = vperm.slane %v1796, 0
    %1813 = vrot.lane.b32.xlu0 %v1797, 112
    %v1814 = vpop.permute.xlu0 %1813
    %1815 = vrot.lane.b32.xlu0 %v1798, 112
    %v1816 = vpop.permute.xlu0 %1815
    %1817 = vrot.lane.b32.xlu0 %v1799, 112
    %v1818 = vpop.permute.xlu0 %1817
    %1819 = vrot.lane.b32.xlu0 %v1800, 112
    %v1820 = vpop.permute.xlu0 %1819
    %1821 = vrot.lane.b32.xlu0 %v1801, 112
    %v1822 = vpop.permute.xlu0 %1821
    %1823 = vrot.lane.b32.xlu0 %v1802, 112
    %v1824 = vpop.permute.xlu0 %1823
    %1825 = vrot.lane.b32.xlu0 %v1803, 112
    %v1826 = vpop.permute.xlu0 %1825
    %1827 = vrot.lane.b32.xlu0 %v1804, 112
    %v1828 = vpop.permute.xlu0 %1827
    %1829 = vrot.lane.b32.xlu0 %v1805, 112
    %v1830 = vpop.permute.xlu0 %1829
    %1831 = vrot.lane.b32.xlu0 %v1806, 112
    %v1832 = vpop.permute.xlu0 %1831
    %1833 = vrot.lane.b32.xlu0 %v1807, 112
    %v1834 = vpop.permute.xlu0 %1833
    %1835 = vrot.lane.b32.xlu0 %v1808, 112
    %v1836 = vpop.permute.xlu0 %1835
    %1837 = vrot.lane.b32.xlu0 %v1809, 112
    %v1838 = vpop.permute.xlu0 %1837
    %1839 = vrot.lane.b32.xlu0 %v1810, 112
    %v1840 = vpop.permute.xlu0 %1839
    %1841 = vrot.lane.b32.xlu0 %v1811, 112
    %v1842 = vpop.permute.xlu0 %1841
    %1843 = vrot.lane.b32.xlu0 %v1812, 112
    %v1844 = vpop.permute.xlu0 %1843
    %1861 = vst.msk [vmem:[%s6 + $0x8] sm:$0x1] %vm188, %v1814
    %1862 = vst.msk [vmem:[%s6 + $0x18] sm:$0x1] %vm188, %v1816
    %1863 = vst.msk [vmem:[%s6 + $0x28] sm:$0x1] %vm188, %v1818
    %1864 = vst.msk [vmem:[%s6 + $0x38] sm:$0x1] %vm188, %v1820
    %1865 = vst.msk [vmem:[%s6 + $0x48] sm:$0x1] %vm188, %v1822
    %1866 = vst.msk [vmem:[%s6 + $0x58] sm:$0x1] %vm188, %v1824
    %1867 = vst.msk [vmem:[%s6 + $0x68] sm:$0x1] %vm188, %v1826
    %1868 = vst.msk [vmem:[%s6 + $0x78] sm:$0x1] %vm188, %v1828
    %1869 = vst.msk [vmem:[%s6 + $0x88] sm:$0x1] %vm188, %v1830
    %1870 = vst.msk [vmem:[%s6 + $0x98] sm:$0x1] %vm188, %v1832
    %1871 = vst.msk [vmem:[%s6 + $0xa8] sm:$0x1] %vm188, %v1834
    %1872 = vst.msk [vmem:[%s6 + $0xb8] sm:$0x1] %vm188, %v1836
    %1873 = vst.msk [vmem:[%s6 + $0xc8] sm:$0x1] %vm188, %v1838
    %1874 = vst.msk [vmem:[%s6 + $0xd8] sm:$0x1] %vm188, %v1840
    %1875 = vst.msk [vmem:[%s6 + $0xe8] sm:$0x1] %vm188, %v1842
    %1876 = vst.msk [vmem:[%s6 + $0xf8] sm:$0x1] %vm188, %v1844
    %v1879 = vrot.slane %v1781, 1
    %v1880 = vrot.slane %v1781, 2
    %v1881 = vrot.slane %v1781, 3
    %v1882 = vrot.slane %v1781, 4
    %v1883 = vrot.slane %v1781, 5
    %v1884 = vrot.slane %v1781, 6
    %v1885 = vrot.slane %v1781, 7
    %v1886 = vrot.slane %v1782, 1
    %v1887 = vrot.slane %v1782, 2
    %v1888 = vrot.slane %v1782, 3
    %v1889 = vrot.slane %v1782, 4
    %v1890 = vrot.slane %v1782, 5
    %v1891 = vrot.slane %v1782, 6
    %v1892 = vrot.slane %v1782, 7
    %1907 = vst.msk [vmem:[%s8 + $0x8] sm:$0x1] %vm233, %v1781
    %1908 = vst.msk [vmem:[%s8 + $0x18] sm:$0x1] %vm233, %v1879
    %1909 = vst.msk [vmem:[%s8 + $0x28] sm:$0x1] %vm233, %v1880
    %1910 = vst.msk [vmem:[%s8 + $0x38] sm:$0x1] %vm233, %v1881
    %1911 = vst.msk [vmem:[%s8 + $0x48] sm:$0x1] %vm233, %v1882
    %1912 = vst.msk [vmem:[%s8 + $0x58] sm:$0x1] %vm233, %v1883
    %1913 = vst.msk [vmem:[%s8 + $0x68] sm:$0x1] %vm233, %v1884
    %1914 = vst.msk [vmem:[%s8 + $0x78] sm:$0x1] %vm233, %v1885
    %1915 = vst.msk [vmem:[%s8 + $0x88] sm:$0x1] %vm233, %v1782
    %1916 = vst.msk [vmem:[%s8 + $0x98] sm:$0x1] %vm233, %v1886
    %1917 = vst.msk [vmem:[%s8 + $0xa8] sm:$0x1] %vm233, %v1887
    %1918 = vst.msk [vmem:[%s8 + $0xb8] sm:$0x1] %vm233, %v1888
    %1919 = vst.msk [vmem:[%s8 + $0xc8] sm:$0x1] %vm233, %v1889
    %1920 = vst.msk [vmem:[%s8 + $0xd8] sm:$0x1] %vm233, %v1890
    %1921 = vst.msk [vmem:[%s8 + $0xe8] sm:$0x1] %vm233, %v1891
    %1922 = vst.msk [vmem:[%s8 + $0xf8] sm:$0x1] %vm233, %v1892
    %v1923 = vld [vmem:[%s6] sm:$0xff]
    %v1924 = vld [vmem:[%s6 + $0x8] sm:$0x1]
    %v1925 = vld [vmem:[%s6 + $0x10] sm:$0xff]
    %v1926 = vld [vmem:[%s6 + $0x18] sm:$0x1]
    %v1927 = vld [vmem:[%s6 + $0x20] sm:$0xff]
    %v1928 = vld [vmem:[%s6 + $0x28] sm:$0x1]
    %v1929 = vld [vmem:[%s6 + $0x30] sm:$0xff]
    %v1930 = vld [vmem:[%s6 + $0x38] sm:$0x1]
    %v1931 = vld [vmem:[%s6 + $0x40] sm:$0xff]
    %v1932 = vld [vmem:[%s6 + $0x48] sm:$0x1]
    %v1933 = vld [vmem:[%s6 + $0x50] sm:$0xff]
    %v1934 = vld [vmem:[%s6 + $0x58] sm:$0x1]
    %v1935 = vld [vmem:[%s6 + $0x60] sm:$0xff]
    %v1936 = vld [vmem:[%s6 + $0x68] sm:$0x1]
    %v1937 = vld [vmem:[%s6 + $0x70] sm:$0xff]
    %v1938 = vld [vmem:[%s6 + $0x78] sm:$0x1]
    %v1939 = vld [vmem:[%s6 + $0x80] sm:$0xff]
    %v1940 = vld [vmem:[%s6 + $0x88] sm:$0x1]
    %v1941 = vld [vmem:[%s6 + $0x90] sm:$0xff]
    %v1942 = vld [vmem:[%s6 + $0x98] sm:$0x1]
    %v1943 = vld [vmem:[%s6 + $0xa0] sm:$0xff]
    %v1944 = vld [vmem:[%s6 + $0xa8] sm:$0x1]
    %v1945 = vld [vmem:[%s6 + $0xb0] sm:$0xff]
    %v1946 = vld [vmem:[%s6 + $0xb8] sm:$0x1]
    %v1947 = vld [vmem:[%s6 + $0xc0] sm:$0xff]
    %v1948 = vld [vmem:[%s6 + $0xc8] sm:$0x1]
    %v1949 = vld [vmem:[%s6 + $0xd0] sm:$0xff]
    %v1950 = vld [vmem:[%s6 + $0xd8] sm:$0x1]
    %v1951 = vld [vmem:[%s6 + $0xe0] sm:$0xff]
    %v1952 = vld [vmem:[%s6 + $0xe8] sm:$0x1]
    %v1953 = vld [vmem:[%s6 + $0xf0] sm:$0xff]
    %v1954 = vld [vmem:[%s6 + $0xf8] sm:$0x1]
    %v1955 = vld [vmem:[%s8] sm:$0xff]
    %v1956 = vld [vmem:[%s8 + $0x8] sm:$0x1]
    %v1957 = vld [vmem:[%s8 + $0x10] sm:$0xff]
    %v1958 = vld [vmem:[%s8 + $0x18] sm:$0x1]
    %v1959 = vld [vmem:[%s8 + $0x20] sm:$0xff]
    %v1960 = vld [vmem:[%s8 + $0x28] sm:$0x1]
    %v1961 = vld [vmem:[%s8 + $0x30] sm:$0xff]
    %v1962 = vld [vmem:[%s8 + $0x38] sm:$0x1]
    %v1963 = vld [vmem:[%s8 + $0x40] sm:$0xff]
    %v1964 = vld [vmem:[%s8 + $0x48] sm:$0x1]
    %v1965 = vld [vmem:[%s8 + $0x50] sm:$0xff]
    %v1966 = vld [vmem:[%s8 + $0x58] sm:$0x1]
    %v1967 = vld [vmem:[%s8 + $0x60] sm:$0xff]
    %v1968 = vld [vmem:[%s8 + $0x68] sm:$0x1]
    %v1969 = vld [vmem:[%s8 + $0x70] sm:$0xff]
    %v1970 = vld [vmem:[%s8 + $0x78] sm:$0x1]
    %v1971 = vld [vmem:[%s8 + $0x80] sm:$0xff]
    %v1972 = vld [vmem:[%s8 + $0x88] sm:$0x1]
    %v1973 = vld [vmem:[%s8 + $0x90] sm:$0xff]
    %v1974 = vld [vmem:[%s8 + $0x98] sm:$0x1]
    %v1975 = vld [vmem:[%s8 + $0xa0] sm:$0xff]
    %v1976 = vld [vmem:[%s8 + $0xa8] sm:$0x1]
    %v1977 = vld [vmem:[%s8 + $0xb0] sm:$0xff]
    %v1978 = vld [vmem:[%s8 + $0xb8] sm:$0x1]
    %v1979 = vld [vmem:[%s8 + $0xc0] sm:$0xff]
    %v1980 = vld [vmem:[%s8 + $0xc8] sm:$0x1]
    %v1981 = vld [vmem:[%s8 + $0xd0] sm:$0xff]
    %v1982 = vld [vmem:[%s8 + $0xd8] sm:$0x1]
    %v1983 = vld [vmem:[%s8 + $0xe0] sm:$0xff]
    %v1984 = vld [vmem:[%s8 + $0xe8] sm:$0x1]
    %v1985 = vld [vmem:[%s8 + $0xf0] sm:$0xff]
    %v1986 = vld [vmem:[%s8 + $0xf8] sm:$0x1]
    %v1987 = vld [vmem:[%s4] sm:$0x1]
    %v1988 = vld [vmem:[%s5] sm:$0x1]
    %v1990 = vperm.slane %v1987, 0
    %v1992 = vmul.f32 %v1990, %v1923
    %v1993 = vmul.f32 %v1990, %v1924
    %v1994 = vmul.f32 %v1990, %v1925
    %v1995 = vmul.f32 %v1990, %v1926
    %v1996 = vmul.f32 %v1990, %v1927
    %v1997 = vmul.f32 %v1990, %v1928
    %v1998 = vmul.f32 %v1990, %v1929
    %v1999 = vmul.f32 %v1990, %v1930
    %v2000 = vmul.f32 %v1990, %v1931
    %v2001 = vmul.f32 %v1990, %v1932
    %v2002 = vmul.f32 %v1990, %v1933
    %v2003 = vmul.f32 %v1990, %v1934
    %v2004 = vmul.f32 %v1990, %v1935
    %v2005 = vmul.f32 %v1990, %v1936
    %v2006 = vmul.f32 %v1990, %v1937
    %v2007 = vmul.f32 %v1990, %v1938
    %v2008 = vmul.f32 %v1990, %v1939
    %v2009 = vmul.f32 %v1990, %v1940
    %v2010 = vmul.f32 %v1990, %v1941
    %v2011 = vmul.f32 %v1990, %v1942
    %v2012 = vmul.f32 %v1990, %v1943
    %v2013 = vmul.f32 %v1990, %v1944
    %v2014 = vmul.f32 %v1990, %v1945
    %v2015 = vmul.f32 %v1990, %v1946
    %v2016 = vmul.f32 %v1990, %v1947
    %v2017 = vmul.f32 %v1990, %v1948
    %v2018 = vmul.f32 %v1990, %v1949
    %v2019 = vmul.f32 %v1990, %v1950
    %v2020 = vmul.f32 %v1990, %v1951
    %v2021 = vmul.f32 %v1990, %v1952
    %v2022 = vmul.f32 %v1990, %v1953
    %v2023 = vmul.f32 %v1990, %v1954
    %v2024 = vmul.f32 %v1992, %v1923
    %v2025 = vmul.f32 %v1993, %v1924
    %v2026 = vmul.f32 %v1994, %v1925
    %v2027 = vmul.f32 %v1995, %v1926
    %v2028 = vmul.f32 %v1996, %v1927
    %v2029 = vmul.f32 %v1997, %v1928
    %v2030 = vmul.f32 %v1998, %v1929
    %v2031 = vmul.f32 %v1999, %v1930
    %v2032 = vmul.f32 %v2000, %v1931
    %v2033 = vmul.f32 %v2001, %v1932
    %v2034 = vmul.f32 %v2002, %v1933
    %v2035 = vmul.f32 %v2003, %v1934
    %v2036 = vmul.f32 %v2004, %v1935
    %v2037 = vmul.f32 %v2005, %v1936
    %v2038 = vmul.f32 %v2006, %v1937
    %v2039 = vmul.f32 %v2007, %v1938
    %v2040 = vmul.f32 %v2008, %v1939
    %v2041 = vmul.f32 %v2009, %v1940
    %v2042 = vmul.f32 %v2010, %v1941
    %v2043 = vmul.f32 %v2011, %v1942
    %v2044 = vmul.f32 %v2012, %v1943
    %v2045 = vmul.f32 %v2013, %v1944
    %v2046 = vmul.f32 %v2014, %v1945
    %v2047 = vmul.f32 %v2015, %v1946
    %v2048 = vmul.f32 %v2016, %v1947
    %v2049 = vmul.f32 %v2017, %v1948
    %v2050 = vmul.f32 %v2018, %v1949
    %v2051 = vmul.f32 %v2019, %v1950
    %v2052 = vmul.f32 %v2020, %v1951
    %v2053 = vmul.f32 %v2021, %v1952
    %v2054 = vmul.f32 %v2022, %v1953
    %v2055 = vmul.f32 %v2023, %v1954
    %v2056 = vsel %vm86, %v2024, 0.0
    %2057 = vadd.xlane.f32.xlu0 %v2056
    %v2058 = vpop.xlane.xlu0 %2057
    %v2059 = vsel %vm188, %v2025, 0.0
    %2060 = vadd.xlane.f32.xlu0 %v2059
    %v2061 = vpop.xlane.xlu0 %2060
    %v2062 = vsel %vm86, %v2026, 0.0
    %2063 = vadd.xlane.f32.xlu0 %v2062
    %v2064 = vpop.xlane.xlu0 %2063
    %v2065 = vsel %vm188, %v2027, 0.0
    %2066 = vadd.xlane.f32.xlu0 %v2065
    %v2067 = vpop.xlane.xlu0 %2066
    %v2068 = vsel %vm86, %v2028, 0.0
    %2069 = vadd.xlane.f32.xlu0 %v2068
    %v2070 = vpop.xlane.xlu0 %2069
    %v2071 = vsel %vm188, %v2029, 0.0
    %2072 = vadd.xlane.f32.xlu0 %v2071
    %v2073 = vpop.xlane.xlu0 %2072
    %v2074 = vsel %vm86, %v2030, 0.0
    %2075 = vadd.xlane.f32.xlu0 %v2074
    %v2076 = vpop.xlane.xlu0 %2075
    %v2077 = vsel %vm188, %v2031, 0.0
    %2078 = vadd.xlane.f32.xlu0 %v2077
    %v2079 = vpop.xlane.xlu0 %2078
    %v2080 = vsel %vm86, %v2032, 0.0
    %2081 = vadd.xlane.f32.xlu0 %v2080
    %v2082 = vpop.xlane.xlu0 %2081
    %v2083 = vsel %vm188, %v2033, 0.0
    %2084 = vadd.xlane.f32.xlu0 %v2083
    %v2085 = vpop.xlane.xlu0 %2084
    %v2086 = vsel %vm86, %v2034, 0.0
    %2087 = vadd.xlane.f32.xlu0 %v2086
    %v2088 = vpop.xlane.xlu0 %2087
    %v2089 = vsel %vm188, %v2035, 0.0
    %2090 = vadd.xlane.f32.xlu0 %v2089
    %v2091 = vpop.xlane.xlu0 %2090
    %v2092 = vsel %vm86, %v2036, 0.0
    %2093 = vadd.xlane.f32.xlu0 %v2092
    %v2094 = vpop.xlane.xlu0 %2093
    %v2095 = vsel %vm188, %v2037, 0.0
    %2096 = vadd.xlane.f32.xlu0 %v2095
    %v2097 = vpop.xlane.xlu0 %2096
    %v2098 = vsel %vm86, %v2038, 0.0
    %2099 = vadd.xlane.f32.xlu0 %v2098
    %v2100 = vpop.xlane.xlu0 %2099
    %v2101 = vsel %vm188, %v2039, 0.0
    %2102 = vadd.xlane.f32.xlu0 %v2101
    %v2103 = vpop.xlane.xlu0 %2102
    %v2104 = vsel %vm86, %v2040, 0.0
    %2105 = vadd.xlane.f32.xlu0 %v2104
    %v2106 = vpop.xlane.xlu0 %2105
    %v2107 = vsel %vm188, %v2041, 0.0
    %2108 = vadd.xlane.f32.xlu0 %v2107
    %v2109 = vpop.xlane.xlu0 %2108
    %v2110 = vsel %vm86, %v2042, 0.0
    %2111 = vadd.xlane.f32.xlu0 %v2110
    %v2112 = vpop.xlane.xlu0 %2111
    %v2113 = vsel %vm188, %v2043, 0.0
    %2114 = vadd.xlane.f32.xlu0 %v2113
    %v2115 = vpop.xlane.xlu0 %2114
    %v2116 = vsel %vm86, %v2044, 0.0
    %2117 = vadd.xlane.f32.xlu0 %v2116
    %v2118 = vpop.xlane.xlu0 %2117
    %v2119 = vsel %vm188, %v2045, 0.0
    %2120 = vadd.xlane.f32.xlu0 %v2119
    %v2121 = vpop.xlane.xlu0 %2120
    %v2122 = vsel %vm86, %v2046, 0.0
    %2123 = vadd.xlane.f32.xlu0 %v2122
    %v2124 = vpop.xlane.xlu0 %2123
    %v2125 = vsel %vm188, %v2047, 0.0
    %2126 = vadd.xlane.f32.xlu0 %v2125
    %v2127 = vpop.xlane.xlu0 %2126
    %v2128 = vsel %vm86, %v2048, 0.0
    %2129 = vadd.xlane.f32.xlu0 %v2128
    %v2130 = vpop.xlane.xlu0 %2129
    %v2131 = vsel %vm188, %v2049, 0.0
    %2132 = vadd.xlane.f32.xlu0 %v2131
    %v2133 = vpop.xlane.xlu0 %2132
    %v2134 = vsel %vm86, %v2050, 0.0
    %2135 = vadd.xlane.f32.xlu0 %v2134
    %v2136 = vpop.xlane.xlu0 %2135
    %v2137 = vsel %vm188, %v2051, 0.0
    %2138 = vadd.xlane.f32.xlu0 %v2137
    %v2139 = vpop.xlane.xlu0 %2138
    %v2140 = vsel %vm86, %v2052, 0.0
    %2141 = vadd.xlane.f32.xlu0 %v2140
    %v2142 = vpop.xlane.xlu0 %2141
    %v2143 = vsel %vm188, %v2053, 0.0
    %2144 = vadd.xlane.f32.xlu0 %v2143
    %v2145 = vpop.xlane.xlu0 %2144
    %v2146 = vsel %vm86, %v2054, 0.0
    %2147 = vadd.xlane.f32.xlu0 %v2146
    %v2148 = vpop.xlane.xlu0 %2147
    %v2149 = vsel %vm188, %v2055, 0.0
    %2150 = vadd.xlane.f32.xlu0 %v2149
    %v2151 = vpop.xlane.xlu0 %2150
    %v2153 = vperm.slane %v1988, 0
    %v2155 = vmul.f32 %v2153, %v1955
    %v2156 = vmul.f32 %v2153, %v1956
    %v2157 = vmul.f32 %v2153, %v1957
    %v2158 = vmul.f32 %v2153, %v1958
    %v2159 = vmul.f32 %v2153, %v1959
    %v2160 = vmul.f32 %v2153, %v1960
    %v2161 = vmul.f32 %v2153, %v1961
    %v2162 = vmul.f32 %v2153, %v1962
    %v2163 = vmul.f32 %v2153, %v1963
    %v2164 = vmul.f32 %v2153, %v1964
    %v2165 = vmul.f32 %v2153, %v1965
    %v2166 = vmul.f32 %v2153, %v1966
    %v2167 = vmul.f32 %v2153, %v1967
    %v2168 = vmul.f32 %v2153, %v1968
    %v2169 = vmul.f32 %v2153, %v1969
    %v2170 = vmul.f32 %v2153, %v1970
    %v2171 = vmul.f32 %v2153, %v1971
    %v2172 = vmul.f32 %v2153, %v1972
    %v2173 = vmul.f32 %v2153, %v1973
    %v2174 = vmul.f32 %v2153, %v1974
    %v2175 = vmul.f32 %v2153, %v1975
    %v2176 = vmul.f32 %v2153, %v1976
    %v2177 = vmul.f32 %v2153, %v1977
    %v2178 = vmul.f32 %v2153, %v1978
    %v2179 = vmul.f32 %v2153, %v1979
    %v2180 = vmul.f32 %v2153, %v1980
    %v2181 = vmul.f32 %v2153, %v1981
    %v2182 = vmul.f32 %v2153, %v1982
    %v2183 = vmul.f32 %v2153, %v1983
    %v2184 = vmul.f32 %v2153, %v1984
    %v2185 = vmul.f32 %v2153, %v1985
    %v2186 = vmul.f32 %v2153, %v1986
    %v2187 = vmul.f32 %v2155, %v1955
    %v2188 = vmul.f32 %v2156, %v1956
    %v2189 = vmul.f32 %v2157, %v1957
    %v2190 = vmul.f32 %v2158, %v1958
    %v2191 = vmul.f32 %v2159, %v1959
    %v2192 = vmul.f32 %v2160, %v1960
    %v2193 = vmul.f32 %v2161, %v1961
    %v2194 = vmul.f32 %v2162, %v1962
    %v2195 = vmul.f32 %v2163, %v1963
    %v2196 = vmul.f32 %v2164, %v1964
    %v2197 = vmul.f32 %v2165, %v1965
    %v2198 = vmul.f32 %v2166, %v1966
    %v2199 = vmul.f32 %v2167, %v1967
    %v2200 = vmul.f32 %v2168, %v1968
    %v2201 = vmul.f32 %v2169, %v1969
    %v2202 = vmul.f32 %v2170, %v1970
    %v2203 = vmul.f32 %v2171, %v1971
    %v2204 = vmul.f32 %v2172, %v1972
    %v2205 = vmul.f32 %v2173, %v1973
    %v2206 = vmul.f32 %v2174, %v1974
    %v2207 = vmul.f32 %v2175, %v1975
    %v2208 = vmul.f32 %v2176, %v1976
    %v2209 = vmul.f32 %v2177, %v1977
    %v2210 = vmul.f32 %v2178, %v1978
    %v2211 = vmul.f32 %v2179, %v1979
    %v2212 = vmul.f32 %v2180, %v1980
    %v2213 = vmul.f32 %v2181, %v1981
    %v2214 = vmul.f32 %v2182, %v1982
    %v2215 = vmul.f32 %v2183, %v1983
    %v2216 = vmul.f32 %v2184, %v1984
    %v2217 = vmul.f32 %v2185, %v1985
    %v2218 = vmul.f32 %v2186, %v1986
    %v2219 = vsel %vm120, %v2187, 0.0
    %2220 = vadd.xlane.f32.xlu0 %v2219
    %v2221 = vpop.xlane.xlu0 %2220
    %v2222 = vsel %vm233, %v2188, 0.0
    %2223 = vadd.xlane.f32.xlu0 %v2222
    %v2224 = vpop.xlane.xlu0 %2223
    %v2225 = vsel %vm120, %v2189, 0.0
    %2226 = vadd.xlane.f32.xlu0 %v2225
    %v2227 = vpop.xlane.xlu0 %2226
    %v2228 = vsel %vm233, %v2190, 0.0
    %2229 = vadd.xlane.f32.xlu0 %v2228
    %v2230 = vpop.xlane.xlu0 %2229
    %v2231 = vsel %vm120, %v2191, 0.0
    %2232 = vadd.xlane.f32.xlu0 %v2231
    %v2233 = vpop.xlane.xlu0 %2232
    %v2234 = vsel %vm233, %v2192, 0.0
    %2235 = vadd.xlane.f32.xlu0 %v2234
    %v2236 = vpop.xlane.xlu0 %2235
    %v2237 = vsel %vm120, %v2193, 0.0
    %2238 = vadd.xlane.f32.xlu0 %v2237
    %v2239 = vpop.xlane.xlu0 %2238
    %v2240 = vsel %vm233, %v2194, 0.0
    %2241 = vadd.xlane.f32.xlu0 %v2240
    %v2242 = vpop.xlane.xlu0 %2241
    %v2243 = vsel %vm120, %v2195, 0.0
    %2244 = vadd.xlane.f32.xlu0 %v2243
    %v2245 = vpop.xlane.xlu0 %2244
    %v2246 = vsel %vm233, %v2196, 0.0
    %2247 = vadd.xlane.f32.xlu0 %v2246
    %v2248 = vpop.xlane.xlu0 %2247
    %v2249 = vsel %vm120, %v2197, 0.0
    %2250 = vadd.xlane.f32.xlu0 %v2249
    %v2251 = vpop.xlane.xlu0 %2250
    %v2252 = vsel %vm233, %v2198, 0.0
    %2253 = vadd.xlane.f32.xlu0 %v2252
    %v2254 = vpop.xlane.xlu0 %2253
    %v2255 = vsel %vm120, %v2199, 0.0
    %2256 = vadd.xlane.f32.xlu0 %v2255
    %v2257 = vpop.xlane.xlu0 %2256
    %v2258 = vsel %vm233, %v2200, 0.0
    %2259 = vadd.xlane.f32.xlu0 %v2258
    %v2260 = vpop.xlane.xlu0 %2259
    %v2261 = vsel %vm120, %v2201, 0.0
    %2262 = vadd.xlane.f32.xlu0 %v2261
    %v2263 = vpop.xlane.xlu0 %2262
    %v2264 = vsel %vm233, %v2202, 0.0
    %2265 = vadd.xlane.f32.xlu0 %v2264
    %v2266 = vpop.xlane.xlu0 %2265
    %v2267 = vsel %vm120, %v2203, 0.0
    %2268 = vadd.xlane.f32.xlu0 %v2267
    %v2269 = vpop.xlane.xlu0 %2268
    %v2270 = vsel %vm233, %v2204, 0.0
    %2271 = vadd.xlane.f32.xlu0 %v2270
    %v2272 = vpop.xlane.xlu0 %2271
    %v2273 = vsel %vm120, %v2205, 0.0
    %2274 = vadd.xlane.f32.xlu0 %v2273
    %v2275 = vpop.xlane.xlu0 %2274
    %v2276 = vsel %vm233, %v2206, 0.0
    %2277 = vadd.xlane.f32.xlu0 %v2276
    %v2278 = vpop.xlane.xlu0 %2277
    %v2279 = vsel %vm120, %v2207, 0.0
    %2280 = vadd.xlane.f32.xlu0 %v2279
    %v2281 = vpop.xlane.xlu0 %2280
    %v2282 = vsel %vm233, %v2208, 0.0
    %2283 = vadd.xlane.f32.xlu0 %v2282
    %v2284 = vpop.xlane.xlu0 %2283
    %v2285 = vsel %vm120, %v2209, 0.0
    %2286 = vadd.xlane.f32.xlu0 %v2285
    %v2287 = vpop.xlane.xlu0 %2286
    %v2288 = vsel %vm233, %v2210, 0.0
    %2289 = vadd.xlane.f32.xlu0 %v2288
    %v2290 = vpop.xlane.xlu0 %2289
    %v2291 = vsel %vm120, %v2211, 0.0
    %2292 = vadd.xlane.f32.xlu0 %v2291
    %v2293 = vpop.xlane.xlu0 %2292
    %v2294 = vsel %vm233, %v2212, 0.0
    %2295 = vadd.xlane.f32.xlu0 %v2294
    %v2296 = vpop.xlane.xlu0 %2295
    %v2297 = vsel %vm120, %v2213, 0.0
    %2298 = vadd.xlane.f32.xlu0 %v2297
    %v2299 = vpop.xlane.xlu0 %2298
    %v2300 = vsel %vm233, %v2214, 0.0
    %2301 = vadd.xlane.f32.xlu0 %v2300
    %v2302 = vpop.xlane.xlu0 %2301
    %v2303 = vsel %vm120, %v2215, 0.0
    %2304 = vadd.xlane.f32.xlu0 %v2303
    %v2305 = vpop.xlane.xlu0 %2304
    %v2306 = vsel %vm233, %v2216, 0.0
    %2307 = vadd.xlane.f32.xlu0 %v2306
    %v2308 = vpop.xlane.xlu0 %2307
    %v2309 = vsel %vm120, %v2217, 0.0
    %2310 = vadd.xlane.f32.xlu0 %v2309
    %v2311 = vpop.xlane.xlu0 %2310
    %v2312 = vsel %vm233, %v2218, 0.0
    %2313 = vadd.xlane.f32.xlu0 %v2312
    %v2314 = vpop.xlane.xlu0 %2313
    %v2315 = vadd.f32 %v2058, %v2221
    %v2316 = vadd.f32 %v2061, %v2224
    %v2317 = vadd.f32 %v2064, %v2227
    %v2318 = vadd.f32 %v2067, %v2230
    %v2319 = vadd.f32 %v2070, %v2233
    %v2320 = vadd.f32 %v2073, %v2236
    %v2321 = vadd.f32 %v2076, %v2239
    %v2322 = vadd.f32 %v2079, %v2242
    %v2323 = vadd.f32 %v2082, %v2245
    %v2324 = vadd.f32 %v2085, %v2248
    %v2325 = vadd.f32 %v2088, %v2251
    %v2326 = vadd.f32 %v2091, %v2254
    %v2327 = vadd.f32 %v2094, %v2257
    %v2328 = vadd.f32 %v2097, %v2260
    %v2329 = vadd.f32 %v2100, %v2263
    %v2330 = vadd.f32 %v2103, %v2266
    %v2331 = vadd.f32 %v2106, %v2269
    %v2332 = vadd.f32 %v2109, %v2272
    %v2333 = vadd.f32 %v2112, %v2275
    %v2334 = vadd.f32 %v2115, %v2278
    %v2335 = vadd.f32 %v2118, %v2281
    %v2336 = vadd.f32 %v2121, %v2284
    %v2337 = vadd.f32 %v2124, %v2287
    %v2338 = vadd.f32 %v2127, %v2290
    %v2339 = vadd.f32 %v2130, %v2293
    %v2340 = vadd.f32 %v2133, %v2296
    %v2341 = vadd.f32 %v2136, %v2299
    %v2342 = vadd.f32 %v2139, %v2302
    %v2343 = vadd.f32 %v2142, %v2305
    %v2344 = vadd.f32 %v2145, %v2308
    %v2345 = vadd.f32 %v2148, %v2311
    %v2346 = vadd.f32 %v2151, %v2314
    %v2379 = vlaneseq
    %v2380 = vand.u32 %v2379, 127
    %v2381 = vperm.slane %v2315, %v2380
    %v2382 = vadd.s32 %v2380, 4294967288
    %v2383 = vperm.slane %v2316, %v2382
    %vm2384 = vcmask 130112
    %v2385 = vsel %vm2384, %v2383, %v2381
    %v2386 = vperm.slane %v2317, %v2380
    %v2387 = vperm.slane %v2318, %v2382
    %v2388 = vsel %vm2384, %v2387, %v2386
    %v2389 = vperm.slane %v2319, %v2380
    %v2390 = vperm.slane %v2320, %v2382
    %v2391 = vsel %vm2384, %v2390, %v2389
    %v2392 = vperm.slane %v2321, %v2380
    %v2393 = vperm.slane %v2322, %v2382
    %v2394 = vsel %vm2384, %v2393, %v2392
    %v2395 = vperm.slane %v2323, %v2380
    %v2396 = vperm.slane %v2324, %v2382
    %v2397 = vsel %vm2384, %v2396, %v2395
    %v2398 = vperm.slane %v2325, %v2380
    %v2399 = vperm.slane %v2326, %v2382
    %v2400 = vsel %vm2384, %v2399, %v2398
    %v2401 = vperm.slane %v2327, %v2380
    %v2402 = vperm.slane %v2328, %v2382
    %v2403 = vsel %vm2384, %v2402, %v2401
    %v2404 = vperm.slane %v2329, %v2380
    %v2405 = vperm.slane %v2330, %v2382
    %v2406 = vsel %vm2384, %v2405, %v2404
    %v2407 = vperm.slane %v2331, %v2380
    %v2408 = vperm.slane %v2332, %v2382
    %v2409 = vsel %vm2384, %v2408, %v2407
    %v2410 = vperm.slane %v2333, %v2380
    %v2411 = vperm.slane %v2334, %v2382
    %v2412 = vsel %vm2384, %v2411, %v2410
    %v2413 = vperm.slane %v2335, %v2380
    %v2414 = vperm.slane %v2336, %v2382
    %v2415 = vsel %vm2384, %v2414, %v2413
    %v2416 = vperm.slane %v2337, %v2380
    %v2417 = vperm.slane %v2338, %v2382
    %v2418 = vsel %vm2384, %v2417, %v2416
    %v2419 = vperm.slane %v2339, %v2380
    %v2420 = vperm.slane %v2340, %v2382
    %v2421 = vsel %vm2384, %v2420, %v2419
    %v2422 = vperm.slane %v2341, %v2380
    %v2423 = vperm.slane %v2342, %v2382
    %v2424 = vsel %vm2384, %v2423, %v2422
    %v2425 = vperm.slane %v2343, %v2380
    %v2426 = vperm.slane %v2344, %v2382
    %v2427 = vsel %vm2384, %v2426, %v2425
    %v2428 = vperm.slane %v2345, %v2380
    %v2429 = vperm.slane %v2346, %v2382
    %v2430 = vsel %vm2384, %v2429, %v2428
    %vm2431 = vcmask 1041409
    %v2432 = vsel %vm2431, %v2388, %v2385
    %vm2433 = vcmask 1042434
    %v2434 = vsel %vm2433, %v2391, %v2432
    %vm2435 = vcmask 1043459
    %v2436 = vsel %vm2435, %v2394, %v2434
    %vm2437 = vcmask 1044484
    %v2438 = vsel %vm2437, %v2397, %v2436
    %vm2439 = vcmask 1045509
    %v2440 = vsel %vm2439, %v2400, %v2438
    %vm2441 = vcmask 1046534
    %v2442 = vsel %vm2441, %v2403, %v2440
    %vm2443 = vcmask 1047559
    %v2444 = vsel %vm2443, %v2406, %v2442
    %v2445 = vsel %vm2431, %v2412, %v2409
    %v2446 = vsel %vm2433, %v2415, %v2445
    %v2447 = vsel %vm2435, %v2418, %v2446
    %v2448 = vsel %vm2437, %v2421, %v2447
    %v2449 = vsel %vm2439, %v2424, %v2448
    %v2450 = vsel %vm2441, %v2427, %v2449
    %v2451 = vsel %vm2443, %v2430, %v2450
    %vm2454 = vcmask 72704
    %2455 = vst.msk [vmem:[#allocation8] sm:$0xff] %vm2454, %v2444
    %2456 = vst.msk [vmem:[#allocation8 + $0x8] sm:$0xff] %vm2454, %v2451
    // Predicated region
    $region38: #{tpu_custom_call.1} parent=1 // pred_check
      _
    $region39: #{tpu_custom_call.1} parent=1 // pred_check_branch
      %2458 = sbr.rel (0) target = $region41
    $region40: #{tpu_custom_call.1} parent=1 // pred_region
      _
    $region41: #{tpu_custom_call.1} parent=1 // pred_fallthru
      _
    // Predicated region
    $region42: #{tpu_custom_call.1} parent=1 // pred_check
      _
    $region43: #{tpu_custom_call.1} parent=1 // pred_check_branch
      %2460 = sbr.rel (0) target = $region45
    $region44: #{tpu_custom_call.1} parent=1 // pred_region
      %2462 = vsyncadd [#allocation4], 0
      %s2463 = sshll.u32 [#allocation8], 4
      %s2464 = int_to_ptr.vmem [resolvable:$true] %s2463
      %s2465 = sshll.u32 %s7, 4
      %s2466 = int_to_ptr.hbm [resolvable:$true] %s2465
      %2471 = dma.vmem_to_hbm [thread:$0]  %s2464, 256, %s2466, [#allocation4], 128, 128, 8
    $region45: #{tpu_custom_call.1} parent=1 // pred_fallthru
      _
    // Predicated region
    $region46: #{tpu_custom_call.1} parent=1 // pred_check
      _
    $region47: #{tpu_custom_call.1} parent=1 // pred_check_branch
      %2473 = sbr.rel (0) target = $region49
    $region48: #{tpu_custom_call.1} parent=1 // pred_region
      _
    $region49: #{tpu_custom_call.1} parent=1 // pred_fallthru
      _
    // Predicated region
    $region50: #{tpu_custom_call.1} parent=1 // pred_check
      _
    $region51: #{tpu_custom_call.1} parent=1 // pred_check_branch
      %2475 = sbr.rel (0) target = $region53
    $region52: #{tpu_custom_call.1} parent=1 // pred_region
      _
    $region53: #{tpu_custom_call.1} parent=1 // pred_fallthru
      _
    // Predicated region
    $region54: #{tpu_custom_call.1} parent=1 // pred_check
      _
    $region55: #{tpu_custom_call.1} parent=1 // pred_check_branch
      %2477 = sbr.rel (0) target = $region57
    $region56: #{tpu_custom_call.1} parent=1 // pred_region
      %2479 = dma.done [#allocation4], 256
    $region57: #{tpu_custom_call.1} parent=1 // pred_fallthru
      _
    // Predicated region
    $region58: #{tpu_custom_call.1} parent=1 // pred_check
      _
    $region59: #{tpu_custom_call.1} parent=1 // pred_check_branch
      %2481 = sbr.rel (0) target = $region61
    $region60: #{tpu_custom_call.1} parent=1 // pred_region
      _
    $region61: #{tpu_custom_call.1} parent=1 // pred_fallthru
      _
    %2482 = vsyncpa [#allocation3], 1
    %2483 = vsyncpa [#allocation6], 1
    %2484 = vsyncpa [#allocation4], 1

</llo_original>
